<compile_context>
chip_gen: v5e
topology: v5e:2x2
jax: 0.10.0
libtpu: 0.0.40
codegen_flags: <defaults>
</compile_context>

<pallas_src>
import functools

import jax
import jax.numpy as jnp
from jax.experimental import pallas as pl
from jax.experimental.pallas import tpu as pltpu

_BN_EPS = 1e-5
_LANES = 128


def _round_up(c, m=_LANES):
    return ((c + m - 1) // m) * m


# ----------------------------------------------------------------------------
# Fused bottleneck kernel
# ----------------------------------------------------------------------------

def _fused_bottleneck_kernel(
    # static config (bound via functools.partial)
    k, s, pad, H, W, Ho, Wo, TR, residual,
    # inputs
    x_ref, w1_ref, b1_ref, dw_ref, b2_ref, w3_ref, b3_ref,
    # output
    o_ref,
    # scratch
    exp_ref,
):
    Cin = x_ref.shape[-1]
    Cexp = w1_ref.shape[-1]
    Cout = w3_ref.shape[-1]
    Hp = H + 2 * pad
    Wp = W + 2 * pad

    r = pl.program_id(1)

    # ---- once per image (r == 0): zero the padded border of the *expanded*
    #      activation (the zero padding the depthwise conv actually needs) and
    #      compute the 1x1 expand (+ folded BN1 bias + ReLU) for the whole image.
    @pl.when(r == 0)
    def _():
        if pad > 0:
            exp_ref[0:pad, :, :] = jnp.zeros((pad, Wp, Cexp), jnp.float32)
            exp_ref[pad + H:Hp, :, :] = jnp.zeros((pad, Wp, Cexp), jnp.float32)
            exp_ref[pad:pad + H, 0:pad, :] = jnp.zeros((H, pad, Cexp), jnp.float32)
            exp_ref[pad:pad + H, pad + W:Wp, :] = jnp.zeros((H, pad, Cexp), jnp.float32)
        w1 = w1_ref[...]
        b1 = b1_ref[...]
        CH = 8                                      # row chunk bounds vreg pressure
        for h0 in range(0, H, CH):
            hh = min(CH, H - h0)
            xin = x_ref[0, h0:h0 + hh, :, :].reshape(hh * W, Cin).astype(jnp.bfloat16)
            e = jnp.dot(xin, w1, preferred_element_type=jnp.float32)
            e = jnp.maximum(e + b1, 0.0)
            exp_ref[pad + h0:pad + h0 + hh, pad:pad + W, :] = e.reshape(hh, W, Cexp)

    # ---- depthwise kxk conv (+ folded BN2 bias + ReLU): accumulate in vregs
    r0 = pl.multiple_of(r * TR, TR)                 # first output row of this tile
    row0 = r0 * s                                   # first padded-exp row it reads
    dw = dw_ref[...]                                # (k*k, Cexp), hoisted once
    acc = None
    for dy in range(k):
        for dx in range(k):
            if s == 1:
                patch = exp_ref[pl.ds(row0 + dy, TR), dx:dx + Wo, :]
            else:
                patch = exp_ref[pl.ds(row0 + dy, TR, stride=s),
                                pl.ds(dx, Wo, stride=s), :]
            tap = patch * dw[dy * k + dx]
            acc = tap if acc is None else acc + tap
    z = jnp.maximum(acc + b2_ref[...], 0.0)         # (TR, Wo, Cexp)

    # ---- 1x1 project conv (+ folded BN3 bias): MXU, bf16 operands / f32 acc
    y = jnp.dot(z.reshape(TR * Wo, Cexp).astype(jnp.bfloat16), w3_ref[...],
                preferred_element_type=jnp.float32)
    y = (y + b3_ref[...]).reshape(TR, Wo, Cout)

    # ---- residual add, reusing the input block already resident in VMEM
    if residual:
        y = y + x_ref[0, pl.ds(r0, TR), :, :]

    o_ref[0] = y


# ----------------------------------------------------------------------------
# pallas_call wrapper (one fused call per Bottleneck)
# ----------------------------------------------------------------------------

def _pick_row_tile(Ho, Wo, c_exp):
    """Largest divisor of Ho (preferring multiples of 8) whose f32 accumulator
    (TR, Wo, c_exp) stays around <= 64 KiB of vregs."""
    budget = 64 * 1024
    max_tr = max(8, budget // max(1, Wo * c_exp * 4))
    divs = [d for d in range(1, Ho + 1) if Ho % d == 0 and d <= max_tr]
    mult8 = [d for d in divs if d % 8 == 0]
    if mult8:
        return max(mult8)
    return max(divs)


def bottleneck_forward(x_nhwc, p, kernel_size, stride, residual):
    N, H, W, Cin = x_nhwc.shape
    c_exp = p["w1"].shape[1]
    Cout = p["w3"].shape[1]
    k = kernel_size
    s = stride
    pad = ((k - 1) // 2) * s                        # matches the PyTorch module
    Ho = (H + 2 * pad - k) // s + 1
    Wo = (W + 2 * pad - k) // s + 1
    Hp, Wp = H + 2 * pad, W + 2 * pad
    if residual:
        assert s == 1 and Cin == Cout and Ho == H and Wo == W, "residual shape mismatch"

    TR = _pick_row_tile(Ho, Wo, c_exp)
    R = Ho // TR

    kernel = functools.partial(
        _fused_bottleneck_kernel, k, s, pad, H, W, Ho, Wo, TR, residual)

    # VMEM budget: double-buffered x / out blocks + weights + persistent expanded
    # activation scratch, +8 MiB headroom, capped at 48 MiB (headroom under v7x's
    # 64 MiB per-TensorCore VMEM; raise toward ~100 MiB only on v5e/v6e if needed).
    x_blk = H * W * Cin * 4
    out_blk = TR * Wo * Cout * 4
    w_bytes = (Cin * c_exp + k * k * c_exp + c_exp * Cout) * 2 + (2 * c_exp + Cout) * 4
    exp_bytes = Hp * Wp * c_exp * 4
    need = 2 * x_blk + 2 * out_blk + 2 * w_bytes + exp_bytes
    vmem_limit = int(min(max(need + (8 << 20), 32 << 20), 48 << 20))

    grid_spec = pltpu.PrefetchScalarGridSpec(
        num_scalar_prefetch=0,
        grid=(N, R),
        in_specs=[
            # full image per batch element; revisited across row tiles -> DMA'd once/batch
            pl.BlockSpec((1, H, W, Cin), lambda n, r: (n, 0, 0, 0)),
            pl.BlockSpec((Cin, c_exp), lambda n, r: (0, 0)),
            pl.BlockSpec((1, c_exp), lambda n, r: (0, 0)),
            pl.BlockSpec((k * k, c_exp), lambda n, r: (0, 0)),
            pl.BlockSpec((1, c_exp), lambda n, r: (0, 0)),
            pl.BlockSpec((c_exp, Cout), lambda n, r: (0, 0)),
            pl.BlockSpec((1, Cout), lambda n, r: (0, 0)),
        ],
        out_specs=pl.BlockSpec((1, TR, Wo, Cout), lambda n, r: (n, r, 0, 0)),
        scratch_shapes=[
            # whole-image expanded activation in padded (depthwise) coordinates
            pltpu.VMEM((Hp, Wp, c_exp), jnp.float32),
        ],
    )

    return pl.pallas_call(
        kernel,
        out_shape=jax.ShapeDtypeStruct((N, Ho, Wo, Cout), jnp.float32),
        grid_spec=grid_spec,
        compiler_params=pltpu.CompilerParams(
            # batch is megacore-parallel; row tiles must stay sequential so the
            # expand computed at r == 0 is reused by the later row tiles.
            dimension_semantics=("parallel", "arbitrary"),
            vmem_limit_bytes=vmem_limit,
        ),
    )(x_nhwc, p["w1"], p["b1"], p["dw"], p["b2"], p["w3"], p["b3"])


# ----------------------------------------------------------------------------
# Parameter prep (random params; eval-mode BN folded, scales folded into weights,
# all channel axes zero-padded to a multiple of 128 lanes)
# ----------------------------------------------------------------------------

def _fold_bn(gamma, beta, mean, var):
    scale = gamma / jnp.sqrt(var + _BN_EPS)
    bias = beta - mean * scale
    return scale, bias


def _make_bn_params(key, c):
    k1, k2, k3, k4 = jax.random.split(key, 4)
    gamma = jax.random.uniform(k1, (c,), jnp.float32, 0.5, 1.5)
    beta = 0.1 * jax.random.normal(k2, (c,), jnp.float32)
    mean = 0.1 * jax.random.normal(k3, (c,), jnp.float32)
    var = jax.random.uniform(k4, (c,), jnp.float32, 0.5, 1.5)
    return _fold_bn(gamma, beta, mean, var)


def make_bottleneck_params(key, in_feat, out_feat, alpha, t, kernel_size):
    c_in = int(in_feat * alpha)
    c_exp = int(c_in * t)
    c_out = int(out_feat * alpha)
    cp_in, cp_exp, cp_out = _round_up(c_in), _round_up(c_exp), _round_up(c_out)
    kk = kernel_size * kernel_size

    keys = jax.random.split(key, 8)
    w1 = 0.1 * jax.random.normal(keys[0], (c_in, c_exp), jnp.float32)    # 1x1 expand (bias=False)
    dw = 0.1 * jax.random.normal(keys[1], (kk, c_exp), jnp.float32)      # depthwise kxk
    w3 = 0.1 * jax.random.normal(keys[2], (c_exp, c_out), jnp.float32)   # 1x1 project
    bdw = 0.1 * jax.random.normal(keys[3], (c_exp,), jnp.float32)        # depthwise conv bias
    bpr = 0.1 * jax.random.normal(keys[4], (c_out,), jnp.float32)        # project conv bias
    s1, b1 = _make_bn_params(keys[5], c_exp)
    s2, b2 = _make_bn_params(keys[6], c_exp)
    s3, b3 = _make_bn_params(keys[7], c_out)

    # Fold BN scales into conv weights; conv biases folded into the BN biases.
    w1 = w1 * s1[None, :]
    dw = dw * s2[None, :]
    w3 = w3 * s3[None, :]
    b2 = b2 + bdw * s2
    b3 = b3 + bpr * s3

    # Zero-pad every channel axis to a multiple of 128 (lane-dense loads/stores,
    # full-K MXU); padded channels remain exactly 0 through the whole chain.
    w1p = jnp.zeros((cp_in, cp_exp), jnp.float32).at[:c_in, :c_exp].set(w1)
    dwp = jnp.zeros((kk, cp_exp), jnp.float32).at[:, :c_exp].set(dw)
    w3p = jnp.zeros((cp_exp, cp_out), jnp.float32).at[:c_exp, :c_out].set(w3)
    b1p = jnp.zeros((1, cp_exp), jnp.float32).at[0, :c_exp].set(b1)
    b2p = jnp.zeros((1, cp_exp), jnp.float32).at[0, :c_exp].set(b2)
    b3p = jnp.zeros((1, cp_out), jnp.float32).at[0, :c_out].set(b3)

    # MXU weights in bf16 (f32 accumulation); elementwise math stays f32.
    return dict(
        w1=w1p.astype(jnp.bfloat16), b1=b1p,
        dw=dwp, b2=b2p,
        w3=w3p.astype(jnp.bfloat16), b3=b3p,
        c_out=c_out,
    )


def inverted_residual_forward(x_nchw, params_list, kernel_size, stride):
    # NCHW (PyTorch) -> NHWC (kernel layout), channels zero-padded to 128 lanes.
    x = jnp.transpose(x_nchw, (0, 2, 3, 1)).astype(jnp.float32)
    cin = x.shape[-1]
    x = jnp.pad(x, ((0, 0), (0, 0), (0, 0), (0, _round_up(cin) - cin)))
    for i, p in enumerate(params_list):
        s = stride if i == 0 else 1
        r = (i != 0)
        x = bottleneck_forward(x, p, kernel_size, s, r)
    # drop channel padding, back to NCHW
    x = x[..., :params_list[-1]["c_out"]]
    return jnp.transpose(x, (0, 3, 1, 2))


# ----------------------------------------------------------------------------
# Demo
# ----------------------------------------------------------------------------

if __name__ == "__main__":
    # InvertedResidual(in_feat=4, out_feat=4, alpha=1.0, t=2, kernel_size=3, stride=1, n=2)
    in_feat, out_feat, alpha, t, kernel_size, stride, n = 4, 4, 1.0, 2, 3, 1, 2

    key = jax.random.PRNGKey(0)
    key, kx = jax.random.split(key)
    x = jax.random.normal(kx, (2, 4, 16, 16), jnp.float32)   # NCHW, like PyTorch

    params_list = []
    for i in range(n):
        key, kb = jax.random.split(key)
        cin = in_feat if i == 0 else out_feat
        params_list.append(make_bottleneck_params(kb, cin, out_feat, alpha, t, kernel_size))

    out = inverted_residual_forward(x, params_list, kernel_size, stride)
    jax.block_until_ready(out)
    assert out.shape == (2, int(out_feat * alpha), 16, 16), out.shape
    print("KERNEL_OK")
</pallas_src>

<mosaic_0001>
module attributes {stable_mosaic.version = 11 : i64} {
  func.func @_fused_bottleneck_kernel(%arg0: i32, %arg1: i32, %arg2: memref<1x16x16x128xf32, #tpu.memory_space<vmem>>, %arg3: memref<128x128xbf16, #tpu.memory_space<vmem>>, %arg4: memref<1x128xf32, #tpu.memory_space<vmem>>, %arg5: memref<9x128xf32, #tpu.memory_space<vmem>>, %arg6: memref<1x128xf32, #tpu.memory_space<vmem>>, %arg7: memref<128x128xbf16, #tpu.memory_space<vmem>>, %arg8: memref<1x128xf32, #tpu.memory_space<vmem>>, %arg9: memref<1x8x16x128xf32, #tpu.memory_space<vmem>>, %arg10: memref<18x18x128xf32, #tpu.memory_space<vmem>>) attributes {dimension_semantics = [#tpu.dimension_semantics<parallel>, #tpu.dimension_semantics<arbitrary>], iteration_bounds = array<i64: 2, 2>, scalar_prefetch = 0 : i64, scratch_operands = 1 : i64, tpu.core_type = #tpu.core_type<tc>, window_params = [{transform_indices = @transform_0, window_bounds = array<i64: 1, 16, 16, 128>}, {pipeline_mode = #tpu.pipeline_mode<synchronous>, transform_indices = @transform_1, window_bounds = array<i64: 128, 128>}, {pipeline_mode = #tpu.pipeline_mode<synchronous>, transform_indices = @transform_2, window_bounds = array<i64: 1, 128>}, {pipeline_mode = #tpu.pipeline_mode<synchronous>, transform_indices = @transform_3, window_bounds = array<i64: 9, 128>}, {pipeline_mode = #tpu.pipeline_mode<synchronous>, transform_indices = @transform_4, window_bounds = array<i64: 1, 128>}, {pipeline_mode = #tpu.pipeline_mode<synchronous>, transform_indices = @transform_5, window_bounds = array<i64: 128, 128>}, {pipeline_mode = #tpu.pipeline_mode<synchronous>, transform_indices = @transform_6, window_bounds = array<i64: 1, 128>}, {transform_indices = @transform_7, window_bounds = array<i64: 1, 8, 16, 128>}]} {
    %c0_i32 = arith.constant 0 : i32
    %0 = arith.cmpi eq, %arg1, %c0_i32 : i32
    %1 = arith.extui %0 : i1 to i32
    %c0_i32_0 = arith.constant 0 : i32
    %2 = arith.cmpi ne, %1, %c0_i32_0 : i32
    scf.if %2 {
      %cst_37 = arith.constant 0.000000e+00 : f32
      %104 = vector.broadcast %cst_37 : f32 to vector<1x18x128xf32>
      %c0_38 = arith.constant 0 : index
      %c0_39 = arith.constant 0 : index
      %c0_40 = arith.constant 0 : index
      %105 = vector.load %arg10[%c0_38, %c0_39, %c0_40] : memref<18x18x128xf32, #tpu.memory_space<vmem>>, vector<1x18x128xf32>
      tpu.vector_store %arg10[%c0_38, %c0_39, %c0_40], %104 {strides = array<i32>} : memref<18x18x128xf32, #tpu.memory_space<vmem>>, vector<1x18x128xf32>,
      %cst_41 = arith.constant 0.000000e+00 : f32
      %106 = vector.broadcast %cst_41 : f32 to vector<1x18x128xf32>
      %c17 = arith.constant 17 : index
      %c0_42 = arith.constant 0 : index
      %c0_43 = arith.constant 0 : index
      %107 = vector.load %arg10[%c17, %c0_42, %c0_43] : memref<18x18x128xf32, #tpu.memory_space<vmem>>, vector<1x18x128xf32>
      tpu.vector_store %arg10[%c17, %c0_42, %c0_43], %106 {strides = array<i32>} : memref<18x18x128xf32, #tpu.memory_space<vmem>>, vector<1x18x128xf32>,
      %cst_44 = arith.constant 0.000000e+00 : f32
      %108 = vector.broadcast %cst_44 : f32 to vector<16x1x128xf32>
      %c1_45 = arith.constant 1 : index
      %c0_46 = arith.constant 0 : index
      %c0_47 = arith.constant 0 : index
      %109 = vector.load %arg10[%c1_45, %c0_46, %c0_47] : memref<18x18x128xf32, #tpu.memory_space<vmem>>, vector<16x1x128xf32>
      tpu.vector_store %arg10[%c1_45, %c0_46, %c0_47], %108 {strides = array<i32>} : memref<18x18x128xf32, #tpu.memory_space<vmem>>, vector<16x1x128xf32>,
      %cst_48 = arith.constant 0.000000e+00 : f32
      %110 = vector.broadcast %cst_48 : f32 to vector<16x1x128xf32>
      %c1_49 = arith.constant 1 : index
      %c17_50 = arith.constant 17 : index
      %c0_51 = arith.constant 0 : index
      %111 = vector.load %arg10[%c1_49, %c17_50, %c0_51] : memref<18x18x128xf32, #tpu.memory_space<vmem>>, vector<16x1x128xf32>
      tpu.vector_store %arg10[%c1_49, %c17_50, %c0_51], %110 {strides = array<i32>} : memref<18x18x128xf32, #tpu.memory_space<vmem>>, vector<16x1x128xf32>,
      %c0_52 = arith.constant 0 : index
      %c0_53 = arith.constant 0 : index
      %112 = vector.load %arg3[%c0_52, %c0_53] : memref<128x128xbf16, #tpu.memory_space<vmem>>, vector<128x128xbf16>
      %c0_54 = arith.constant 0 : index
      %c0_55 = arith.constant 0 : index
      %113 = vector.load %arg4[%c0_54, %c0_55] : memref<1x128xf32, #tpu.memory_space<vmem>>, vector<1x128xf32>
      %c0_56 = arith.constant 0 : index
      %c0_57 = arith.constant 0 : index
      %c0_58 = arith.constant 0 : index
      %c0_59 = arith.constant 0 : index
      %114 = vector.load %arg2[%c0_56, %c0_57, %c0_58, %c0_59] : memref<1x16x16x128xf32, #tpu.memory_space<vmem>>, vector<1x8x16x128xf32>
      %115 = vector.shape_cast %114 : vector<1x8x16x128xf32> to vector<8x16x128xf32>
      %116 = vector.shape_cast %115 : vector<8x16x128xf32> to vector<128x128xf32>
      %117 = arith.truncf %116 : vector<128x128xf32> to vector<128x128xbf16>
      %cst_60 = arith.constant dense<0.000000e+00> : vector<128x128xf32>
      %118 = tpu.matmul %117, %112, %cst_60 {dimension_numbers = #tpu.dot_dimension_numbers<[1], [0], [0], [1], [0, 0, 1, 1], [], []>} : vector<128x128xbf16>, vector<128x128xbf16>, vector<128x128xf32> -> vector<128x128xf32>
      %119 = vector.broadcast %113 : vector<1x128xf32> to vector<128x128xf32>
      %120 = arith.addf %118, %119 : vector<128x128xf32>
      %cst_61 = arith.constant 0.000000e+00 : f32
      %121 = vector.broadcast %cst_61 : f32 to vector<128x128xf32>
      %122 = arith.maximumf %120, %121 : vector<128x128xf32>
      %123 = vector.shape_cast %122 : vector<128x128xf32> to vector<8x16x128xf32>
      %c1_62 = arith.constant 1 : index
      %c1_63 = arith.constant 1 : index
      %c0_64 = arith.constant 0 : index
      %124 = vector.load %arg10[%c1_62, %c1_63, %c0_64] : memref<18x18x128xf32, #tpu.memory_space<vmem>>, vector<8x16x128xf32>
      tpu.vector_store %arg10[%c1_62, %c1_63, %c0_64], %123 {strides = array<i32>} : memref<18x18x128xf32, #tpu.memory_space<vmem>>, vector<8x16x128xf32>,
      %c0_65 = arith.constant 0 : index
      %c8 = arith.constant 8 : index
      %c0_66 = arith.constant 0 : index
      %c0_67 = arith.constant 0 : index
      %125 = vector.load %arg2[%c0_65, %c8, %c0_66, %c0_67] : memref<1x16x16x128xf32, #tpu.memory_space<vmem>>, vector<1x8x16x128xf32>
      %126 = vector.shape_cast %125 : vector<1x8x16x128xf32> to vector<8x16x128xf32>
      %127 = vector.shape_cast %126 : vector<8x16x128xf32> to vector<128x128xf32>
      %128 = arith.truncf %127 : vector<128x128xf32> to vector<128x128xbf16>
      %cst_68 = arith.constant dense<0.000000e+00> : vector<128x128xf32>
      %129 = tpu.matmul %128, %112, %cst_68 {dimension_numbers = #tpu.dot_dimension_numbers<[1], [0], [0], [1], [0, 0, 1, 1], [], []>} : vector<128x128xbf16>, vector<128x128xbf16>, vector<128x128xf32> -> vector<128x128xf32>
      %130 = vector.broadcast %113 : vector<1x128xf32> to vector<128x128xf32>
      %131 = arith.addf %129, %130 : vector<128x128xf32>
      %cst_69 = arith.constant 0.000000e+00 : f32
      %132 = vector.broadcast %cst_69 : f32 to vector<128x128xf32>
      %133 = arith.maximumf %131, %132 : vector<128x128xf32>
      %134 = vector.shape_cast %133 : vector<128x128xf32> to vector<8x16x128xf32>
      %c9 = arith.constant 9 : index
      %c1_70 = arith.constant 1 : index
      %c0_71 = arith.constant 0 : index
      %135 = vector.load %arg10[%c9, %c1_70, %c0_71] : memref<18x18x128xf32, #tpu.memory_space<vmem>>, vector<8x16x128xf32>
      tpu.vector_store %arg10[%c9, %c1_70, %c0_71], %134 {strides = array<i32>} : memref<18x18x128xf32, #tpu.memory_space<vmem>>, vector<8x16x128xf32>,
    } else {
    }
    %c8_i32 = arith.constant 8 : i32
    %3 = arith.muli %arg1, %c8_i32 : i32
    %4 = tpu.assume_multiple %3, 8 : i32
    %c1_i32 = arith.constant 1 : i32
    %5 = arith.muli %4, %c1_i32 : i32
    %c0 = arith.constant 0 : index
    %c0_1 = arith.constant 0 : index
    %6 = vector.load %arg5[%c0, %c0_1] : memref<9x128xf32, #tpu.memory_space<vmem>>, vector<9x128xf32>
    %c0_i32_2 = arith.constant 0 : i32
    %7 = arith.addi %5, %c0_i32_2 : i32
    %8 = arith.index_cast %7 : i32 to index
    %c0_3 = arith.constant 0 : index
    %c0_4 = arith.constant 0 : index
    %9 = vector.load %arg10[%8, %c0_3, %c0_4] : memref<18x18x128xf32, #tpu.memory_space<vmem>>, vector<8x16x128xf32>
    %10 = vector.extract_strided_slice %6 {offsets = [0, 0], sizes = [1, 128], strides = [1, 1]} : vector<9x128xf32> to vector<1x128xf32>
    %11 = vector.shape_cast %10 : vector<1x128xf32> to vector<128xf32>
    %12 = vector.shape_cast %11 : vector<128xf32> to vector<1x1x128xf32>
    %13 = vector.broadcast %12 : vector<1x1x128xf32> to vector<8x16x128xf32>
    %14 = arith.mulf %9, %13 : vector<8x16x128xf32>
    %c0_i32_5 = arith.constant 0 : i32
    %15 = arith.addi %5, %c0_i32_5 : i32
    %16 = arith.index_cast %15 : i32 to index
    %c1 = arith.constant 1 : index
    %c0_6 = arith.constant 0 : index
    %17 = vector.load %arg10[%16, %c1, %c0_6] : memref<18x18x128xf32, #tpu.memory_space<vmem>>, vector<8x16x128xf32>
    %18 = vector.extract_strided_slice %6 {offsets = [1, 0], sizes = [1, 128], strides = [1, 1]} : vector<9x128xf32> to vector<1x128xf32>
    %19 = vector.shape_cast %18 : vector<1x128xf32> to vector<128xf32>
    %20 = vector.shape_cast %19 : vector<128xf32> to vector<1x1x128xf32>
    %21 = vector.broadcast %20 : vector<1x1x128xf32> to vector<8x16x128xf32>
    %22 = arith.mulf %17, %21 : vector<8x16x128xf32>
    %23 = arith.addf %14, %22 : vector<8x16x128xf32>
    %c0_i32_7 = arith.constant 0 : i32
    %24 = arith.addi %5, %c0_i32_7 : i32
    %25 = arith.index_cast %24 : i32 to index
    %c2 = arith.constant 2 : index
    %c0_8 = arith.constant 0 : index
    %26 = vector.load %arg10[%25, %c2, %c0_8] : memref<18x18x128xf32, #tpu.memory_space<vmem>>, vector<8x16x128xf32>
    %27 = vector.extract_strided_slice %6 {offsets = [2, 0], sizes = [1, 128], strides = [1, 1]} : vector<9x128xf32> to vector<1x128xf32>
    %28 = vector.shape_cast %27 : vector<1x128xf32> to vector<128xf32>
    %29 = vector.shape_cast %28 : vector<128xf32> to vector<1x1x128xf32>
    %30 = vector.broadcast %29 : vector<1x1x128xf32> to vector<8x16x128xf32>
    %31 = arith.mulf %26, %30 : vector<8x16x128xf32>
    %32 = arith.addf %23, %31 : vector<8x16x128xf32>
    %c1_i32_9 = arith.constant 1 : i32
    %33 = arith.addi %5, %c1_i32_9 : i32
    %34 = arith.index_cast %33 : i32 to index
    %c0_10 = arith.constant 0 : index
    %c0_11 = arith.constant 0 : index
    %35 = vector.load %arg10[%34, %c0_10, %c0_11] : memref<18x18x128xf32, #tpu.memory_space<vmem>>, vector<8x16x128xf32>
    %36 = vector.extract_strided_slice %6 {offsets = [3, 0], sizes = [1, 128], strides = [1, 1]} : vector<9x128xf32> to vector<1x128xf32>
    %37 = vector.shape_cast %36 : vector<1x128xf32> to vector<128xf32>
    %38 = vector.shape_cast %37 : vector<128xf32> to vector<1x1x128xf32>
    %39 = vector.broadcast %38 : vector<1x1x128xf32> to vector<8x16x128xf32>
    %40 = arith.mulf %35, %39 : vector<8x16x128xf32>
    %41 = arith.addf %32, %40 : vector<8x16x128xf32>
    %c1_i32_12 = arith.constant 1 : i32
    %42 = arith.addi %5, %c1_i32_12 : i32
    %43 = arith.index_cast %42 : i32 to index
    %c1_13 = arith.constant 1 : index
    %c0_14 = arith.constant 0 : index
    %44 = vector.load %arg10[%43, %c1_13, %c0_14] : memref<18x18x128xf32, #tpu.memory_space<vmem>>, vector<8x16x128xf32>
    %45 = vector.extract_strided_slice %6 {offsets = [4, 0], sizes = [1, 128], strides = [1, 1]} : vector<9x128xf32> to vector<1x128xf32>
    %46 = vector.shape_cast %45 : vector<1x128xf32> to vector<128xf32>
    %47 = vector.shape_cast %46 : vector<128xf32> to vector<1x1x128xf32>
    %48 = vector.broadcast %47 : vector<1x1x128xf32> to vector<8x16x128xf32>
    %49 = arith.mulf %44, %48 : vector<8x16x128xf32>
    %50 = arith.addf %41, %49 : vector<8x16x128xf32>
    %c1_i32_15 = arith.constant 1 : i32
    %51 = arith.addi %5, %c1_i32_15 : i32
    %52 = arith.index_cast %51 : i32 to index
    %c2_16 = arith.constant 2 : index
    %c0_17 = arith.constant 0 : index
    %53 = vector.load %arg10[%52, %c2_16, %c0_17] : memref<18x18x128xf32, #tpu.memory_space<vmem>>, vector<8x16x128xf32>
    %54 = vector.extract_strided_slice %6 {offsets = [5, 0], sizes = [1, 128], strides = [1, 1]} : vector<9x128xf32> to vector<1x128xf32>
    %55 = vector.shape_cast %54 : vector<1x128xf32> to vector<128xf32>
    %56 = vector.shape_cast %55 : vector<128xf32> to vector<1x1x128xf32>
    %57 = vector.broadcast %56 : vector<1x1x128xf32> to vector<8x16x128xf32>
    %58 = arith.mulf %53, %57 : vector<8x16x128xf32>
    %59 = arith.addf %50, %58 : vector<8x16x128xf32>
    %c2_i32 = arith.constant 2 : i32
    %60 = arith.addi %5, %c2_i32 : i32
    %61 = arith.index_cast %60 : i32 to index
    %c0_18 = arith.constant 0 : index
    %c0_19 = arith.constant 0 : index
    %62 = vector.load %arg10[%61, %c0_18, %c0_19] : memref<18x18x128xf32, #tpu.memory_space<vmem>>, vector<8x16x128xf32>
    %63 = vector.extract_strided_slice %6 {offsets = [6, 0], sizes = [1, 128], strides = [1, 1]} : vector<9x128xf32> to vector<1x128xf32>
    %64 = vector.shape_cast %63 : vector<1x128xf32> to vector<128xf32>
    %65 = vector.shape_cast %64 : vector<128xf32> to vector<1x1x128xf32>
    %66 = vector.broadcast %65 : vector<1x1x128xf32> to vector<8x16x128xf32>
    %67 = arith.mulf %62, %66 : vector<8x16x128xf32>
    %68 = arith.addf %59, %67 : vector<8x16x128xf32>
    %c2_i32_20 = arith.constant 2 : i32
    %69 = arith.addi %5, %c2_i32_20 : i32
    %70 = arith.index_cast %69 : i32 to index
    %c1_21 = arith.constant 1 : index
    %c0_22 = arith.constant 0 : index
    %71 = vector.load %arg10[%70, %c1_21, %c0_22] : memref<18x18x128xf32, #tpu.memory_space<vmem>>, vector<8x16x128xf32>
    %72 = vector.extract_strided_slice %6 {offsets = [7, 0], sizes = [1, 128], strides = [1, 1]} : vector<9x128xf32> to vector<1x128xf32>
    %73 = vector.shape_cast %72 : vector<1x128xf32> to vector<128xf32>
    %74 = vector.shape_cast %73 : vector<128xf32> to vector<1x1x128xf32>
    %75 = vector.broadcast %74 : vector<1x1x128xf32> to vector<8x16x128xf32>
    %76 = arith.mulf %71, %75 : vector<8x16x128xf32>
    %77 = arith.addf %68, %76 : vector<8x16x128xf32>
    %c2_i32_23 = arith.constant 2 : i32
    %78 = arith.addi %5, %c2_i32_23 : i32
    %79 = arith.index_cast %78 : i32 to index
    %c2_24 = arith.constant 2 : index
    %c0_25 = arith.constant 0 : index
    %80 = vector.load %arg10[%79, %c2_24, %c0_25] : memref<18x18x128xf32, #tpu.memory_space<vmem>>, vector<8x16x128xf32>
    %81 = vector.extract_strided_slice %6 {offsets = [8, 0], sizes = [1, 128], strides = [1, 1]} : vector<9x128xf32> to vector<1x128xf32>
    %82 = vector.shape_cast %81 : vector<1x128xf32> to vector<128xf32>
    %83 = vector.shape_cast %82 : vector<128xf32> to vector<1x1x128xf32>
    %84 = vector.broadcast %83 : vector<1x1x128xf32> to vector<8x16x128xf32>
    %85 = arith.mulf %80, %84 : vector<8x16x128xf32>
    %86 = arith.addf %77, %85 : vector<8x16x128xf32>
    %c0_26 = arith.constant 0 : index
    %c0_27 = arith.constant 0 : index
    %87 = vector.load %arg6[%c0_26, %c0_27] : memref<1x128xf32, #tpu.memory_space<vmem>>, vector<1x128xf32>
    %88 = vector.shape_cast %87 : vector<1x128xf32> to vector<1x1x128xf32>
    %89 = vector.broadcast %88 : vector<1x1x128xf32> to vector<8x16x128xf32>
    %90 = arith.addf %86, %89 : vector<8x16x128xf32>
    %cst = arith.constant 0.000000e+00 : f32
    %91 = vector.broadcast %cst : f32 to vector<8x16x128xf32>
    %92 = arith.maximumf %90, %91 : vector<8x16x128xf32>
    %93 = vector.shape_cast %92 : vector<8x16x128xf32> to vector<128x128xf32>
    %94 = arith.truncf %93 : vector<128x128xf32> to vector<128x128xbf16>
    %c0_28 = arith.constant 0 : index
    %c0_29 = arith.constant 0 : index
    %95 = vector.load %arg7[%c0_28, %c0_29] : memref<128x128xbf16, #tpu.memory_space<vmem>>, vector<128x128xbf16>
    %cst_30 = arith.constant dense<0.000000e+00> : vector<128x128xf32>
    %96 = tpu.matmul %94, %95, %cst_30 {dimension_numbers = #tpu.dot_dimension_numbers<[1], [0], [0], [1], [0, 0, 1, 1], [], []>} : vector<128x128xbf16>, vector<128x128xbf16>, vector<128x128xf32> -> vector<128x128xf32>
    %c0_31 = arith.constant 0 : index
    %c0_32 = arith.constant 0 : index
    %97 = vector.load %arg8[%c0_31, %c0_32] : memref<1x128xf32, #tpu.memory_space<vmem>>, vector<1x128xf32>
    %98 = vector.broadcast %97 : vector<1x128xf32> to vector<128x128xf32>
    %99 = arith.addf %96, %98 : vector<128x128xf32>
    %100 = vector.shape_cast %99 : vector<128x128xf32> to vector<8x16x128xf32>
    %c0_33 = arith.constant 0 : index
    %c0_34 = arith.constant 0 : index
    %c0_35 = arith.constant 0 : index
    %c0_36 = arith.constant 0 : index
    %101 = vector.load %arg9[%c0_33, %c0_34, %c0_35, %c0_36] : memref<1x8x16x128xf32, #tpu.memory_space<vmem>>, vector<1x8x16x128xf32>
    %102 = vector.shape_cast %101 : vector<1x8x16x128xf32> to vector<8x16x128xf32>
    %103 = vector.shape_cast %100 : vector<8x16x128xf32> to vector<1x8x16x128xf32>
    tpu.vector_store %arg9[%c0_33, %c0_34, %c0_35, %c0_36], %103 {strides = array<i32>} : memref<1x8x16x128xf32, #tpu.memory_space<vmem>>, vector<1x8x16x128xf32>,
    return
  }
  func.func @transform_0(%arg0: i32, %arg1: i32) -> (i32, i32, i32, i32) {
    %c0_i32 = arith.constant 0 : i32
    %c0_i32_0 = arith.constant 0 : i32
    %c0_i32_1 = arith.constant 0 : i32
    %c0_i32_2 = arith.constant 0 : i32
    return %arg0, %c0_i32, %c0_i32_0, %c0_i32_1 : i32, i32, i32, i32
  }
  func.func @transform_1(%arg0: i32, %arg1: i32) -> (i32, i32) {
    %c0_i32 = arith.constant 0 : i32
    %c0_i32_0 = arith.constant 0 : i32
    %c0_i32_1 = arith.constant 0 : i32
    return %c0_i32, %c0_i32_0 : i32, i32
  }
  func.func @transform_2(%arg0: i32, %arg1: i32) -> (i32, i32) {
    %c0_i32 = arith.constant 0 : i32
    %c0_i32_0 = arith.constant 0 : i32
    %c0_i32_1 = arith.constant 0 : i32
    return %c0_i32, %c0_i32_0 : i32, i32
  }
  func.func @transform_3(%arg0: i32, %arg1: i32) -> (i32, i32) {
    %c0_i32 = arith.constant 0 : i32
    %c0_i32_0 = arith.constant 0 : i32
    %c0_i32_1 = arith.constant 0 : i32
    return %c0_i32, %c0_i32_0 : i32, i32
  }
  func.func @transform_4(%arg0: i32, %arg1: i32) -> (i32, i32) {
    %c0_i32 = arith.constant 0 : i32
    %c0_i32_0 = arith.constant 0 : i32
    %c0_i32_1 = arith.constant 0 : i32
    return %c0_i32, %c0_i32_0 : i32, i32
  }
  func.func @transform_5(%arg0: i32, %arg1: i32) -> (i32, i32) {
    %c0_i32 = arith.constant 0 : i32
    %c0_i32_0 = arith.constant 0 : i32
    %c0_i32_1 = arith.constant 0 : i32
    return %c0_i32, %c0_i32_0 : i32, i32
  }
  func.func @transform_6(%arg0: i32, %arg1: i32) -> (i32, i32) {
    %c0_i32 = arith.constant 0 : i32
    %c0_i32_0 = arith.constant 0 : i32
    %c0_i32_1 = arith.constant 0 : i32
    return %c0_i32, %c0_i32_0 : i32, i32
  }
  func.func @transform_7(%arg0: i32, %arg1: i32) -> (i32, i32, i32, i32) {
    %c0_i32 = arith.constant 0 : i32
    %c0_i32_0 = arith.constant 0 : i32
    %c0_i32_1 = arith.constant 0 : i32
    return %arg0, %arg1, %c0_i32, %c0_i32_0 : i32, i32, i32, i32
  }
}

</mosaic_0001>

<llo_original>
// kernel: tpu_custom_call.1
$region0: #{tpu_custom_call.1}
  #allocation0 [shape = 'u32[]', space=smem, size = 0x4, offset = 0x4, fixed_abs, tag = 'smem constant byte address 0x4 - core index']
  #allocation1 [shape = 'u32[72,128]{1,0:T(1,128)}', space=vmem, size = 0x9000, scoped, tag = 'internal scratch']
  #allocation2 [shape = 'f32[18,18,128]{2,1,0:T(8,128)}', space=vmem, size = 0x36000, scoped, tag = 'scratch operand']
  %s0 = inlined_call_operand.hbm [shape: f32[2,16,16,128], index: 0, kind: input, shape index: {}]
  %s1 = inlined_call_operand.hbm [shape: bf16[128,128], index: 1, kind: input, shape index: {}]
  %s2 = inlined_call_operand.vmem [shape: f32[1,128], index: 2, kind: input, shape index: {}]
  %s3 = inlined_call_operand.hbm [shape: f32[9,128], index: 3, kind: input, shape index: {}]
  %s4 = inlined_call_operand.vmem [shape: f32[1,128], index: 4, kind: input, shape index: {}]
  %s5 = inlined_call_operand.hbm [shape: bf16[128,128], index: 5, kind: input, shape index: {}]
  %s6 = inlined_call_operand.vmem [shape: f32[1,128], index: 6, kind: input, shape index: {}]
  %s7 = inlined_call_operand.hbm [shape: f32[2,16,16,128], index: 7, kind: output, shape index: {}]
  %s8 = sld [smem:[#allocation0]]
  $region81: #{tpu_custom_call.1} parent=0
    _
  %s10 = ssub.s32 1, %s8
  %s11 = scalar_select 0, %s10, %s8
  $region1: #{tpu_custom_call.1} parent=0
    #allocation3 [shape = 'u8[262144]{0}', space=vmem, size = 0x40000, scoped, tag = 'input window, operand 0']
    #allocation4 [shape = 's32[2]{0}', space=sflag, size = 0x8, scoped, tag = 'scoped memory for tpu_custom_call.1']
    #allocation5 [shape = 's32[2]{0}', space=sflag, size = 0x8, scoped, tag = 'scoped memory for tpu_custom_call.1']
    #allocation6 [shape = 'u8[32768]{0}', space=vmem, size = 0x8000, scoped, tag = 'input window, operand 1, single buffered']
    #allocation7 [shape = 's32[1]{0}', space=sflag, size = 0x4, scoped, tag = 'scoped memory for tpu_custom_call.1']
    #allocation8 [shape = 'u8[8192]{0}', space=vmem, size = 0x2000, scoped, tag = 'input window, operand 3, single buffered']
    #allocation9 [shape = 'u8[32768]{0}', space=vmem, size = 0x8000, scoped, tag = 'input window, operand 5, single buffered']
    #allocation10 [shape = 's32[1]{0}', space=sflag, size = 0x4, scoped, tag = 'scoped memory for tpu_custom_call.1']
    #allocation11 [shape = 'u8[131072]{0}', space=vmem, size = 0x20000, scoped, tag = 'output window, operand 0']
    %12 = vsyncpa [#allocation4], 0
    %s13 = scalar_lea.sflag [#allocation4], 1
    %14 = vsyncpa %s13, 0
    %15 = vsyncpa [#allocation7], 0
    %16 = vsyncpa [#allocation10], 0
    %17 = vsyncpa [#allocation5], 0
    %s18 = scalar_lea.sflag [#allocation5], 1
    %19 = vsyncpa %s18, 0
    loop: start=0, step=1, limit=6
    $region2: #{tpu_custom_call.1} parent=1 // loop_pre_header
      _
    $region3: #{tpu_custom_call.1} parent=1 // loop_header
      %s21 = sphi 0, %s25
      %p22 = scmp.ge.s32.totalorder %s21, 6
      %s28 = sphi 0, %s40
      %s29 = sphi 0, %s36
      %s30 = sphi 0, %s28
      %s31 = sphi 0, %s29
      %s32 = sphi 0, %s30
      %s33 = sphi 0, %s31
      %s43 = sphi 0, %s45
      %s46 = sphi 0, %s43
      %s47 = sphi 0, %s46
      %s63 = sphi 0, %s47
      %s67 = sphi 0, %s67
      %s69 = sphi 0, %s67
      %s70 = sphi 0, %s69
      %s84 = sphi 0, %s70
      %s88 = sphi 0, %s88
      %s90 = sphi 0, %s88
      %s91 = sphi 0, %s90
      %s105 = sphi 0, %s91
      %s109 = sphi 0, %s109
      %s111 = sphi 0, %s109
      %s112 = sphi 0, %s111
      %s126 = sphi 0, %s112
      %s130 = sphi 0, %s130
      %s132 = sphi 0, %s130
      %s133 = sphi 0, %s132
      %s147 = sphi 0, %s133
      %s151 = sphi 0, %s151
      %s153 = sphi 0, %s151
      %s154 = sphi 0, %s153
      %s168 = sphi 0, %s154
      %s172 = sphi 0, %s172
      %s174 = sphi 0, %s172
      %s175 = sphi 0, %s174
      %s189 = sphi 0, %s175
      %s197 = sphi 0, %s199
      %s200 = sphi 0, %s197
      %s201 = sphi 0, %s200
      %s217 = sphi 0, %s201
    $region4: #{tpu_custom_call.1} parent=1 // loop_header_branch
      %24 = sbr.rel (%p22) target = $region8
    $region5: #{tpu_custom_call.1} parent=1 // loop_body
      %s26 = ssub.s32 %s21, 1
      %s27 = ssub.s32 %s21, 2
      %s34 = sadd.s32 1, %s29
      %p35 = scmp.ge.s32.totalorder %s34, 2
      %s36 = scalar_select %p35, 0, %s34
      %s37 = sadd.s32 1, %s28
      %s38 = scalar_select %p35, %s37, %s28
      %p39 = scmp.ge.s32.totalorder %s38, 2
      %s40 = scalar_select %p39, 0, %s38
      %s41 = ssub.s32 %s28, %s40
      %p42 = scmp.eq.s32.totalorder %s41, 0
      %s44 = sadd.s32 %s43, 1
      %s45 = scalar_select %p42, %s43, %s44
      %p48 = pneg %p42
      %p49 = scmp.eq.s32.totalorder %s21, 3
      %p50 = por %p48, %p49
      %p51 = scmp.ne.s32.totalorder %s43, %s46
      %p52 = scmp.eq.s32.totalorder %s21, 0
      %p53 = por %p51, %p52
      %p54 = scmp.ne.s32.totalorder %s43, %s46
      %p55 = scmp.eq.s32.totalorder %s26, 3
      %p56 = por %p54, %p55
      %p57 = scmp.ne.s32.totalorder %s46, %s47
      %p58 = scmp.eq.s32.totalorder %s26, 0
      %p59 = por %p57, %p58
      %p60 = scmp.ne.s32.totalorder %s46, %s47
      %p61 = scmp.eq.s32.totalorder %s27, 3
      %p62 = por %p60, %p61
      %p64 = scmp.ne.s32.totalorder %s47, %s63
      %p65 = scmp.eq.s32.totalorder %s27, 0
      %p66 = por %p64, %p65
      %s68 = sadd.s32 %s67, 1
      %p71 = scmp.eq.s32.totalorder %s21, 3
      %p72 = scmp.ne.s32.totalorder %s67, %s69
      %p73 = scmp.eq.s32.totalorder %s21, 0
      %p74 = por %p72, %p73
      %p75 = scmp.ne.s32.totalorder %s67, %s69
      %p76 = scmp.eq.s32.totalorder %s26, 3
      %p77 = por %p75, %p76
      %p78 = scmp.ne.s32.totalorder %s69, %s70
      %p79 = scmp.eq.s32.totalorder %s26, 0
      %p80 = por %p78, %p79
      %p81 = scmp.ne.s32.totalorder %s69, %s70
      %p82 = scmp.eq.s32.totalorder %s27, 3
      %p83 = por %p81, %p82
      %p85 = scmp.ne.s32.totalorder %s70, %s84
      %p86 = scmp.eq.s32.totalorder %s27, 0
      %p87 = por %p85, %p86
      %s89 = sadd.s32 %s88, 1
      %p92 = scmp.eq.s32.totalorder %s21, 3
      %p93 = scmp.ne.s32.totalorder %s88, %s90
      %p94 = scmp.eq.s32.totalorder %s21, 0
      %p95 = por %p93, %p94
      %p96 = scmp.ne.s32.totalorder %s88, %s90
      %p97 = scmp.eq.s32.totalorder %s26, 3
      %p98 = por %p96, %p97
      %p99 = scmp.ne.s32.totalorder %s90, %s91
      %p100 = scmp.eq.s32.totalorder %s26, 0
      %p101 = por %p99, %p100
      %p102 = scmp.ne.s32.totalorder %s90, %s91
      %p103 = scmp.eq.s32.totalorder %s27, 3
      %p104 = por %p102, %p103
      %p106 = scmp.ne.s32.totalorder %s91, %s105
      %p107 = scmp.eq.s32.totalorder %s27, 0
      %p108 = por %p106, %p107
      %s110 = sadd.s32 %s109, 1
      %p113 = scmp.eq.s32.totalorder %s21, 3
      %p114 = scmp.ne.s32.totalorder %s109, %s111
      %p115 = scmp.eq.s32.totalorder %s21, 0
      %p116 = por %p114, %p115
      %p117 = scmp.ne.s32.totalorder %s109, %s111
      %p118 = scmp.eq.s32.totalorder %s26, 3
      %p119 = por %p117, %p118
      %p120 = scmp.ne.s32.totalorder %s111, %s112
      %p121 = scmp.eq.s32.totalorder %s26, 0
      %p122 = por %p120, %p121
      %p123 = scmp.ne.s32.totalorder %s111, %s112
      %p124 = scmp.eq.s32.totalorder %s27, 3
      %p125 = por %p123, %p124
      %p127 = scmp.ne.s32.totalorder %s112, %s126
      %p128 = scmp.eq.s32.totalorder %s27, 0
      %p129 = por %p127, %p128
      %s131 = sadd.s32 %s130, 1
      %p134 = scmp.eq.s32.totalorder %s21, 3
      %p135 = scmp.ne.s32.totalorder %s130, %s132
      %p136 = scmp.eq.s32.totalorder %s21, 0
      %p137 = por %p135, %p136
      %p138 = scmp.ne.s32.totalorder %s130, %s132
      %p139 = scmp.eq.s32.totalorder %s26, 3
      %p140 = por %p138, %p139
      %p141 = scmp.ne.s32.totalorder %s132, %s133
      %p142 = scmp.eq.s32.totalorder %s26, 0
      %p143 = por %p141, %p142
      %p144 = scmp.ne.s32.totalorder %s132, %s133
      %p145 = scmp.eq.s32.totalorder %s27, 3
      %p146 = por %p144, %p145
      %p148 = scmp.ne.s32.totalorder %s133, %s147
      %p149 = scmp.eq.s32.totalorder %s27, 0
      %p150 = por %p148, %p149
      %s152 = sadd.s32 %s151, 1
      %p155 = scmp.eq.s32.totalorder %s21, 3
      %p156 = scmp.ne.s32.totalorder %s151, %s153
      %p157 = scmp.eq.s32.totalorder %s21, 0
      %p158 = por %p156, %p157
      %p159 = scmp.ne.s32.totalorder %s151, %s153
      %p160 = scmp.eq.s32.totalorder %s26, 3
      %p161 = por %p159, %p160
      %p162 = scmp.ne.s32.totalorder %s153, %s154
      %p163 = scmp.eq.s32.totalorder %s26, 0
      %p164 = por %p162, %p163
      %p165 = scmp.ne.s32.totalorder %s153, %s154
      %p166 = scmp.eq.s32.totalorder %s27, 3
      %p167 = por %p165, %p166
      %p169 = scmp.ne.s32.totalorder %s154, %s168
      %p170 = scmp.eq.s32.totalorder %s27, 0
      %p171 = por %p169, %p170
      %s173 = sadd.s32 %s172, 1
      %p176 = scmp.eq.s32.totalorder %s21, 3
      %p177 = scmp.ne.s32.totalorder %s172, %s174
      %p178 = scmp.eq.s32.totalorder %s21, 0
      %p179 = por %p177, %p178
      %p180 = scmp.ne.s32.totalorder %s172, %s174
      %p181 = scmp.eq.s32.totalorder %s26, 3
      %p182 = por %p180, %p181
      %p183 = scmp.ne.s32.totalorder %s174, %s175
      %p184 = scmp.eq.s32.totalorder %s26, 0
      %p185 = por %p183, %p184
      %p186 = scmp.ne.s32.totalorder %s174, %s175
      %p187 = scmp.eq.s32.totalorder %s27, 3
      %p188 = por %p186, %p187
      %p190 = scmp.ne.s32.totalorder %s175, %s189
      %p191 = scmp.eq.s32.totalorder %s27, 0
      %p192 = por %p190, %p191
      %s193 = ssub.s32 %s28, %s40
      %s194 = ssub.s32 %s29, %s36
      %s195 = sor.u32 %s193, %s194
      %p196 = scmp.eq.s32.totalorder %s195, 0
      %s198 = sadd.s32 %s197, 1
      %s199 = scalar_select %p196, %s197, %s198
      %p202 = pneg %p196
      %p203 = scmp.eq.s32.totalorder %s21, 3
      %p204 = por %p202, %p203
      %p205 = scmp.ne.s32.totalorder %s197, %s200
      %p206 = scmp.eq.s32.totalorder %s21, 0
      %p207 = por %p205, %p206
      %p208 = scmp.ne.s32.totalorder %s197, %s200
      %p209 = scmp.eq.s32.totalorder %s26, 3
      %p210 = por %p208, %p209
      %p211 = scmp.ne.s32.totalorder %s200, %s201
      %p212 = scmp.eq.s32.totalorder %s26, 0
      %p213 = por %p211, %p212
      %p214 = scmp.ne.s32.totalorder %s200, %s201
      %p215 = scmp.eq.s32.totalorder %s27, 3
      %p216 = por %p214, %p215
      %p218 = scmp.ne.s32.totalorder %s201, %s217
      %p219 = scmp.eq.s32.totalorder %s27, 0
      %p220 = por %p218, %p219
      %p221 = scmp.le.s32.totalorder 1, %s21
      %p222 = scmp.lt.s32.totalorder %s21, 5
      %p223 = pnand %p221, %p222
      %p224 = pneg %p223
      // Predicated region
      $region9: #{tpu_custom_call.1} parent=5 // pred_check
        _
      $region10: #{tpu_custom_call.1} parent=5 // pred_check_branch
        %226 = sbr.rel (%p223) target = $region12
      $region11: #{tpu_custom_call.1} parent=5 // pred_region
        %s227 = ssub.s32 %s21, 1
        // Predicated region
        $region13: #{tpu_custom_call.1} parent=11 // pred_check
          %p228 = pneg %p80
        $region14: #{tpu_custom_call.1} parent=11 // pred_check_branch
          %230 = sbr.rel (%p228) target = $region16
        $region15: #{tpu_custom_call.1} parent=11 // pred_region
          %232 = vsyncadd [#allocation7], 0
          %s233 = sshll.u32 %s1, 4
          %s234 = int_to_ptr.hbm [resolvable:$true] %s233
          %s235 = sshll.u32 [#allocation6], 4
          %s236 = int_to_ptr.vmem [resolvable:$true] %s235
          %241 = dma.hbm_to_vmem [thread:$0]  %s234, 1024, %s236, [#allocation7], 64, 64, 4
        $region16: #{tpu_custom_call.1} parent=11 // pred_fallthru
          _
        // Predicated region
        $region17: #{tpu_custom_call.1} parent=11 // pred_check
          %p242 = pneg %p101
        $region18: #{tpu_custom_call.1} parent=11 // pred_check_branch
          %244 = sbr.rel (%p242) target = $region20
        $region19: #{tpu_custom_call.1} parent=11 // pred_region
          _
        $region20: #{tpu_custom_call.1} parent=11 // pred_fallthru
          _
        // Predicated region
        $region21: #{tpu_custom_call.1} parent=11 // pred_check
          %p245 = pneg %p122
        $region22: #{tpu_custom_call.1} parent=11 // pred_check_branch
          %247 = sbr.rel (%p245) target = $region24
        $region23: #{tpu_custom_call.1} parent=11 // pred_region
          %249 = vsyncadd [#allocation7], 0
          %s250 = sshll.u32 %s3, 4
          %s251 = int_to_ptr.hbm [resolvable:$true] %s250
          %s252 = sshll.u32 [#allocation8], 4
          %s253 = int_to_ptr.vmem [resolvable:$true] %s252
          %258 = dma.hbm_to_vmem [thread:$0]  %s251, 256, %s253, [#allocation7], 128, 128, 8
        $region24: #{tpu_custom_call.1} parent=11 // pred_fallthru
          _
        // Predicated region
        $region25: #{tpu_custom_call.1} parent=11 // pred_check
          %p259 = pneg %p143
        $region26: #{tpu_custom_call.1} parent=11 // pred_check_branch
          %261 = sbr.rel (%p259) target = $region28
        $region27: #{tpu_custom_call.1} parent=11 // pred_region
          _
        $region28: #{tpu_custom_call.1} parent=11 // pred_fallthru
          _
        // Predicated region
        $region29: #{tpu_custom_call.1} parent=11 // pred_check
          %p262 = pneg %p164
        $region30: #{tpu_custom_call.1} parent=11 // pred_check_branch
          %264 = sbr.rel (%p262) target = $region32
        $region31: #{tpu_custom_call.1} parent=11 // pred_region
          %266 = vsyncadd [#allocation10], 0
          %s267 = sshll.u32 %s5, 4
          %s268 = int_to_ptr.hbm [resolvable:$true] %s267
          %s269 = sshll.u32 [#allocation9], 4
          %s270 = int_to_ptr.vmem [resolvable:$true] %s269
          %275 = dma.hbm_to_vmem [thread:$0]  %s268, 1024, %s270, [#allocation10], 64, 64, 4
        $region32: #{tpu_custom_call.1} parent=11 // pred_fallthru
          _
        // Predicated region
        $region33: #{tpu_custom_call.1} parent=11 // pred_check
          %p276 = pneg %p185
        $region34: #{tpu_custom_call.1} parent=11 // pred_check_branch
          %278 = sbr.rel (%p276) target = $region36
        $region35: #{tpu_custom_call.1} parent=11 // pred_region
          _
        $region36: #{tpu_custom_call.1} parent=11 // pred_fallthru
          _
      $region12: #{tpu_custom_call.1} parent=5 // pred_fallthru
        _
      %p279 = scmp.lt.s32.totalorder %s21, 4
      // Predicated region
      $region37: #{tpu_custom_call.1} parent=5 // pred_check
        %p280 = pneg %p279
      $region38: #{tpu_custom_call.1} parent=5 // pred_check_branch
        %282 = sbr.rel (%p280) target = $region40
      $region39: #{tpu_custom_call.1} parent=5 // pred_region
        // Predicated region
        $region41: #{tpu_custom_call.1} parent=39 // pred_check
          %p283 = pneg %p53
        $region42: #{tpu_custom_call.1} parent=39 // pred_check_branch
          %285 = sbr.rel (%p283) target = $region44
        $region43: #{tpu_custom_call.1} parent=39 // pred_region
          %s286 = sand.u32 %s43, 1
          %s287 = scalar_lea.sflag [#allocation4], %s286
          %s288 = sand.u32 %s43, 1
          %s289 = smul.addr %s288, 256
          %s290 = scalar_lea.vmem [#allocation3], %s289
          %292 = vsyncadd %s287, 0
          %s293 = smul.addr %s28, 32
          %s294 = smul.addr %s293, 8
          %s295 = scalar_lea.hbm %s0, %s294
          %s296 = sshll.u32 %s295, 4
          %s297 = int_to_ptr.hbm [resolvable:$true] %s296
          %s298 = sshll.u32 %s290, 4
          %s299 = int_to_ptr.vmem [resolvable:$true] %s298
          %304 = dma.hbm_to_vmem [thread:$0]  %s297, 4096, %s299, %s287, 128, 128, 8
        $region44: #{tpu_custom_call.1} parent=39 // pred_fallthru
          _
      $region40: #{tpu_custom_call.1} parent=5 // pred_fallthru
        _
      %p305 = scmp.le.s32.totalorder 1, %s21
      %p306 = scmp.lt.s32.totalorder %s21, 5
      %p307 = pnand %p305, %p306
      %p308 = pneg %p307
      // Predicated region
      $region45: #{tpu_custom_call.1} parent=5 // pred_check
        _
      $region46: #{tpu_custom_call.1} parent=5 // pred_check_branch
        %310 = sbr.rel (%p307) target = $region48
      $region47: #{tpu_custom_call.1} parent=5 // pred_region
        %s311 = ssub.s32 %s21, 1
        %s312 = sand.u32 %s46, 1
        %s313 = scalar_lea.sflag [#allocation4], %s312
        %s314 = sand.u32 %s46, 1
        %s315 = smul.addr %s314, 256
        %s316 = scalar_lea.vmem [#allocation3], %s315
        // Predicated region
        $region49: #{tpu_custom_call.1} parent=47 // pred_check
          %p317 = pneg %p59
        $region50: #{tpu_custom_call.1} parent=47 // pred_check_branch
          %319 = sbr.rel (%p317) target = $region52
        $region51: #{tpu_custom_call.1} parent=47 // pred_region
          %321 = dma.done %s313, 4096
        $region52: #{tpu_custom_call.1} parent=47 // pred_fallthru
          _
        // Predicated region
        $region53: #{tpu_custom_call.1} parent=47 // pred_check
          %p322 = pneg %p80
        $region54: #{tpu_custom_call.1} parent=47 // pred_check_branch
          %324 = sbr.rel (%p322) target = $region56
        $region55: #{tpu_custom_call.1} parent=47 // pred_region
          %326 = dma.done [#allocation7], 1024
        $region56: #{tpu_custom_call.1} parent=47 // pred_fallthru
          _
        // Predicated region
        $region57: #{tpu_custom_call.1} parent=47 // pred_check
          %p327 = pneg %p122
        $region58: #{tpu_custom_call.1} parent=47 // pred_check_branch
          %329 = sbr.rel (%p327) target = $region60
        $region59: #{tpu_custom_call.1} parent=47 // pred_region
          %331 = dma.done [#allocation7], 256
        $region60: #{tpu_custom_call.1} parent=47 // pred_fallthru
          _
        // Predicated region
        $region61: #{tpu_custom_call.1} parent=47 // pred_check
          %p332 = pneg %p164
        $region62: #{tpu_custom_call.1} parent=47 // pred_check_branch
          %334 = sbr.rel (%p332) target = $region64
        $region63: #{tpu_custom_call.1} parent=47 // pred_region
          %336 = dma.done [#allocation10], 1024
        $region64: #{tpu_custom_call.1} parent=47 // pred_fallthru
          _
        %s337 = sand.u32 %s46, 1
        %s338 = scalar_lea.sflag [#allocation4], %s337
        %s339 = sand.u32 %s46, 1
        %s340 = smul.addr %s339, 256
        %s341 = scalar_lea.vmem [#allocation3], %s340
        %p342 = pneg %p59
        %p343 = pneg %p56
        %p344 = pneg %p80
        %p345 = pneg %p77
        %p346 = pneg %p101
        %p347 = pneg %p98
        %p348 = pneg %p122
        %p349 = pneg %p119
        %p350 = pneg %p143
        %p351 = pneg %p140
        %p352 = pneg %p164
        %p353 = pneg %p161
        %p354 = pneg %p185
        %p355 = pneg %p182
        %p356 = pneg %p213
        %p357 = pneg %p210
        %s358 = sand.u32 %s200, 1
        %s359 = scalar_lea.sflag [#allocation5], %s358
        %s360 = sand.u32 %s200, 1
        %s361 = smul.addr %s360, 128
        %s362 = scalar_lea.vmem [#allocation11], %s361
        %s363 = smul.u32 8, %s31
        %p364 = scmp.eq.s32.totalorder %s31, 0
        // Predicated region
        $region65: #{tpu_custom_call.1} parent=47 // pred_check
          %p365 = pneg %p364
        $region66: #{tpu_custom_call.1} parent=47 // pred_check_branch
          %367 = sbr.rel (%p365) target = $region68
        $region67: #{tpu_custom_call.1} parent=47 // pred_region
          %368 = vst [vmem:[#allocation2] sm:$0xff] 0.0
          %369 = vst [vmem:[#allocation2 + $0x8] sm:$0xff] 0.0
          %370 = vst [vmem:[#allocation2 + $0x10] sm:$0x3] 0.0
          %s371 = scalar_lea.vmem [#allocation2], 408
          %372 = vst [vmem:[%s371] sm:$0xff] 0.0
          %373 = vst [vmem:[%s371 + $0x8] sm:$0xff] 0.0
          %374 = vst [vmem:[%s371 + $0x10] sm:$0x3] 0.0
          %s375 = scalar_lea.vmem [#allocation2], 24
          %376 = vst [vmem:[%s375] sm:$0x1] 0.0
          %377 = vst [vmem:[%s375 + $0x18] sm:$0x1] 0.0
          %378 = vst [vmem:[%s375 + $0x30] sm:$0x1] 0.0
          %379 = vst [vmem:[%s375 + $0x48] sm:$0x1] 0.0
          %380 = vst [vmem:[%s375 + $0x60] sm:$0x1] 0.0
          %381 = vst [vmem:[%s375 + $0x78] sm:$0x1] 0.0
          %382 = vst [vmem:[%s375 + $0x90] sm:$0x1] 0.0
          %383 = vst [vmem:[%s375 + $0xa8] sm:$0x1] 0.0
          %384 = vst [vmem:[%s375 + $0xc0] sm:$0x1] 0.0
          %385 = vst [vmem:[%s375 + $0xd8] sm:$0x1] 0.0
          %386 = vst [vmem:[%s375 + $0xf0] sm:$0x1] 0.0
          %387 = vst [vmem:[%s375 + $0x108] sm:$0x1] 0.0
          %388 = vst [vmem:[%s375 + $0x120] sm:$0x1] 0.0
          %389 = vst [vmem:[%s375 + $0x138] sm:$0x1] 0.0
          %390 = vst [vmem:[%s375 + $0x150] sm:$0x1] 0.0
          %391 = vst [vmem:[%s375 + $0x168] sm:$0x1] 0.0
          %392 = vst [vmem:[%s375 + $0x11] sm:$0x1] 0.0
          %393 = vst [vmem:[%s375 + $0x29] sm:$0x1] 0.0
          %394 = vst [vmem:[%s375 + $0x41] sm:$0x1] 0.0
          %395 = vst [vmem:[%s375 + $0x59] sm:$0x1] 0.0
          %396 = vst [vmem:[%s375 + $0x71] sm:$0x1] 0.0
          %397 = vst [vmem:[%s375 + $0x89] sm:$0x1] 0.0
          %398 = vst [vmem:[%s375 + $0xa1] sm:$0x1] 0.0
          %399 = vst [vmem:[%s375 + $0xb9] sm:$0x1] 0.0
          %400 = vst [vmem:[%s375 + $0xd1] sm:$0x1] 0.0
          %401 = vst [vmem:[%s375 + $0xe9] sm:$0x1] 0.0
          %402 = vst [vmem:[%s375 + $0x101] sm:$0x1] 0.0
          %403 = vst [vmem:[%s375 + $0x119] sm:$0x1] 0.0
          %404 = vst [vmem:[%s375 + $0x131] sm:$0x1] 0.0
          %405 = vst [vmem:[%s375 + $0x149] sm:$0x1] 0.0
          %406 = vst [vmem:[%s375 + $0x161] sm:$0x1] 0.0
          %407 = vst [vmem:[%s375 + $0x179] sm:$0x1] 0.0
          %v408 = vld [vmem:[#allocation6] sm:$0xf]
          %v409 = vld [vmem:[#allocation6 + $0x4] sm:$0xf]
          %v410 = vld [vmem:[#allocation6 + $0x8] sm:$0xf]
          %v411 = vld [vmem:[#allocation6 + $0xc] sm:$0xf]
          %v412 = vld [vmem:[#allocation6 + $0x10] sm:$0xf]
          %v413 = vld [vmem:[#allocation6 + $0x14] sm:$0xf]
          %v414 = vld [vmem:[#allocation6 + $0x18] sm:$0xf]
          %v415 = vld [vmem:[#allocation6 + $0x1c] sm:$0xf]
          %v416 = vld [vmem:[#allocation6 + $0x20] sm:$0xf]
          %v417 = vld [vmem:[#allocation6 + $0x24] sm:$0xf]
          %v418 = vld [vmem:[#allocation6 + $0x28] sm:$0xf]
          %v419 = vld [vmem:[#allocation6 + $0x2c] sm:$0xf]
          %v420 = vld [vmem:[#allocation6 + $0x30] sm:$0xf]
          %v421 = vld [vmem:[#allocation6 + $0x34] sm:$0xf]
          %v422 = vld [vmem:[#allocation6 + $0x38] sm:$0xf]
          %v423 = vld [vmem:[#allocation6 + $0x3c] sm:$0xf]
          %v424 = vld [vmem:[%s2] sm:$0x1]
          %v425 = vld [vmem:[%s316] sm:$0xff]
          %v426 = vld [vmem:[%s316 + $0x8] sm:$0xff]
          %v427 = vld [vmem:[%s316 + $0x10] sm:$0xff]
          %v428 = vld [vmem:[%s316 + $0x18] sm:$0xff]
          %v429 = vld [vmem:[%s316 + $0x20] sm:$0xff]
          %v430 = vld [vmem:[%s316 + $0x28] sm:$0xff]
          %v431 = vld [vmem:[%s316 + $0x30] sm:$0xff]
          %v432 = vld [vmem:[%s316 + $0x38] sm:$0xff]
          %v433 = vld [vmem:[%s316 + $0x40] sm:$0xff]
          %v434 = vld [vmem:[%s316 + $0x48] sm:$0xff]
          %v435 = vld [vmem:[%s316 + $0x50] sm:$0xff]
          %v436 = vld [vmem:[%s316 + $0x58] sm:$0xff]
          %v437 = vld [vmem:[%s316 + $0x60] sm:$0xff]
          %v438 = vld [vmem:[%s316 + $0x68] sm:$0xff]
          %v439 = vld [vmem:[%s316 + $0x70] sm:$0xff]
          %v440 = vld [vmem:[%s316 + $0x78] sm:$0xff]
          %v441 = vpack.c.bf16 %v426, %v425
          %v442 = vpack.c.bf16 %v428, %v427
          %v443 = vpack.c.bf16 %v430, %v429
          %v444 = vpack.c.bf16 %v432, %v431
          %v445 = vpack.c.bf16 %v434, %v433
          %v446 = vpack.c.bf16 %v436, %v435
          %v447 = vpack.c.bf16 %v438, %v437
          %v448 = vpack.c.bf16 %v440, %v439
          %v450 = vperm.slane %v424, 0
          %v468 = vunpack.c.l.b16 %v408
          %v469 = vunpack.c.l.b16 %v409
          %v470 = vunpack.c.l.b16 %v410
          %v471 = vunpack.c.l.b16 %v411
          %v472 = vunpack.c.l.b16 %v412
          %v473 = vunpack.c.l.b16 %v413
          %v474 = vunpack.c.l.b16 %v414
          %v475 = vunpack.c.l.b16 %v415
          %v476 = vunpack.c.l.b16 %v416
          %v477 = vunpack.c.l.b16 %v417
          %v478 = vunpack.c.l.b16 %v418
          %v479 = vunpack.c.l.b16 %v419
          %v480 = vunpack.c.l.b16 %v420
          %v481 = vunpack.c.l.b16 %v421
          %v482 = vunpack.c.l.b16 %v422
          %v483 = vunpack.c.l.b16 %v423
          %v484 = vpack.c.b16 %v469, %v468
          %v485 = vpack.c.b16 %v471, %v470
          %v486 = vpack.c.b16 %v473, %v472
          %v487 = vpack.c.b16 %v475, %v474
          %v488 = vpack.c.b16 %v477, %v476
          %v489 = vpack.c.b16 %v479, %v478
          %v490 = vpack.c.b16 %v481, %v480
          %v491 = vpack.c.b16 %v483, %v482
          %500 = vmatpush.bf16.msra.mxu0 %v491
          %501 = vmatpush.bf16.msra.mxu0 %v490
          %502 = vmatpush.bf16.msra.mxu0 %v489
          %503 = vmatpush.bf16.msra.mxu0 %v488
          %504 = vmatpush.bf16.msra.mxu0 %v487
          %505 = vmatpush.bf16.msra.mxu0 %v486
          %506 = vmatpush.bf16.msra.mxu0 %v485
          %507 = vmatpush.bf16.msra.mxu0 %v484
          %508 = vmatmul.bf16.gmra.mxu0 %v441
          %v509 = vpop.f32.mrf.mxu0
          %v510 = vadd.f32 %v450, %v509
          %v511 = vpop.f32.mrf.mxu0
          %v512 = vadd.f32 %v450, %v511
          %513 = vmatmul.bf16.gmra.mxu0 %v442
          %v514 = vpop.f32.mrf.mxu0
          %v515 = vadd.f32 %v450, %v514
          %v516 = vpop.f32.mrf.mxu0
          %v517 = vadd.f32 %v450, %v516
          %518 = vmatmul.bf16.gmra.mxu0 %v443
          %v519 = vpop.f32.mrf.mxu0
          %v520 = vadd.f32 %v450, %v519
          %v521 = vpop.f32.mrf.mxu0
          %v522 = vadd.f32 %v450, %v521
          %523 = vmatmul.bf16.gmra.mxu0 %v444
          %v524 = vpop.f32.mrf.mxu0
          %v525 = vadd.f32 %v450, %v524
          %v526 = vpop.f32.mrf.mxu0
          %v527 = vadd.f32 %v450, %v526
          %528 = vmatmul.bf16.gmra.mxu0 %v445
          %v529 = vpop.f32.mrf.mxu0
          %v530 = vadd.f32 %v450, %v529
          %v531 = vpop.f32.mrf.mxu0
          %v532 = vadd.f32 %v450, %v531
          %533 = vmatmul.bf16.gmra.mxu0 %v446
          %v534 = vpop.f32.mrf.mxu0
          %v535 = vadd.f32 %v450, %v534
          %v536 = vpop.f32.mrf.mxu0
          %v537 = vadd.f32 %v450, %v536
          %538 = vmatmul.bf16.gmra.mxu0 %v447
          %v539 = vpop.f32.mrf.mxu0
          %v540 = vadd.f32 %v450, %v539
          %v541 = vpop.f32.mrf.mxu0
          %v542 = vadd.f32 %v450, %v541
          %543 = vmatmul.bf16.gmra.mxu0 %v448
          %v544 = vpop.f32.mrf.mxu0
          %v545 = vadd.f32 %v450, %v544
          %v546 = vpop.f32.mrf.mxu0
          %v547 = vadd.f32 %v450, %v546
          %548 = vdwg.mxu0
          %v549 = vmax.f32 %v510, 0.0
          %v550 = vmax.f32 %v512, 0.0
          %v551 = vmax.f32 %v515, 0.0
          %v552 = vmax.f32 %v517, 0.0
          %v553 = vmax.f32 %v520, 0.0
          %v554 = vmax.f32 %v522, 0.0
          %v555 = vmax.f32 %v525, 0.0
          %v556 = vmax.f32 %v527, 0.0
          %v557 = vmax.f32 %v530, 0.0
          %v558 = vmax.f32 %v532, 0.0
          %v559 = vmax.f32 %v535, 0.0
          %v560 = vmax.f32 %v537, 0.0
          %v561 = vmax.f32 %v540, 0.0
          %v562 = vmax.f32 %v542, 0.0
          %v563 = vmax.f32 %v545, 0.0
          %v564 = vmax.f32 %v547, 0.0
          %565 = vst [vmem:[%s375 + $0x1] sm:$0xff] %v549
          %566 = vst [vmem:[%s375 + $0x9] sm:$0xff] %v550
          %567 = vst [vmem:[%s375 + $0x19] sm:$0xff] %v551
          %568 = vst [vmem:[%s375 + $0x21] sm:$0xff] %v552
          %569 = vst [vmem:[%s375 + $0x31] sm:$0xff] %v553
          %570 = vst [vmem:[%s375 + $0x39] sm:$0xff] %v554
          %571 = vst [vmem:[%s375 + $0x49] sm:$0xff] %v555
          %572 = vst [vmem:[%s375 + $0x51] sm:$0xff] %v556
          %573 = vst [vmem:[%s375 + $0x61] sm:$0xff] %v557
          %574 = vst [vmem:[%s375 + $0x69] sm:$0xff] %v558
          %575 = vst [vmem:[%s375 + $0x79] sm:$0xff] %v559
          %576 = vst [vmem:[%s375 + $0x81] sm:$0xff] %v560
          %577 = vst [vmem:[%s375 + $0x91] sm:$0xff] %v561
          %578 = vst [vmem:[%s375 + $0x99] sm:$0xff] %v562
          %579 = vst [vmem:[%s375 + $0xa9] sm:$0xff] %v563
          %580 = vst [vmem:[%s375 + $0xb1] sm:$0xff] %v564
          %s581 = scalar_lea.vmem %s316, 128 [#allocation3]
          %v582 = vld [vmem:[%s581] sm:$0xff]
          %v583 = vld [vmem:[%s581 + $0x8] sm:$0xff]
          %v584 = vld [vmem:[%s581 + $0x10] sm:$0xff]
          %v585 = vld [vmem:[%s581 + $0x18] sm:$0xff]
          %v586 = vld [vmem:[%s581 + $0x20] sm:$0xff]
          %v587 = vld [vmem:[%s581 + $0x28] sm:$0xff]
          %v588 = vld [vmem:[%s581 + $0x30] sm:$0xff]
          %v589 = vld [vmem:[%s581 + $0x38] sm:$0xff]
          %v590 = vld [vmem:[%s581 + $0x40] sm:$0xff]
          %v591 = vld [vmem:[%s581 + $0x48] sm:$0xff]
          %v592 = vld [vmem:[%s581 + $0x50] sm:$0xff]
          %v593 = vld [vmem:[%s581 + $0x58] sm:$0xff]
          %v594 = vld [vmem:[%s581 + $0x60] sm:$0xff]
          %v595 = vld [vmem:[%s581 + $0x68] sm:$0xff]
          %v596 = vld [vmem:[%s581 + $0x70] sm:$0xff]
          %v597 = vld [vmem:[%s581 + $0x78] sm:$0xff]
          %v598 = vpack.c.bf16 %v583, %v582
          %v599 = vpack.c.bf16 %v585, %v584
          %v600 = vpack.c.bf16 %v587, %v586
          %v601 = vpack.c.bf16 %v589, %v588
          %v602 = vpack.c.bf16 %v591, %v590
          %v603 = vpack.c.bf16 %v593, %v592
          %v604 = vpack.c.bf16 %v595, %v594
          %v605 = vpack.c.bf16 %v597, %v596
          %606 = vmatpush.bf16.msra.mxu0 %v491
          %607 = vmatpush.bf16.msra.mxu0 %v490
          %608 = vmatpush.bf16.msra.mxu0 %v489
          %609 = vmatpush.bf16.msra.mxu0 %v488
          %610 = vmatpush.bf16.msra.mxu0 %v487
          %611 = vmatpush.bf16.msra.mxu0 %v486
          %612 = vmatpush.bf16.msra.mxu0 %v485
          %613 = vmatpush.bf16.msra.mxu0 %v484
          %614 = vmatmul.bf16.gmra.mxu0 %v598
          %v615 = vpop.f32.mrf.mxu0
          %v616 = vadd.f32 %v450, %v615
          %v617 = vpop.f32.mrf.mxu0
          %v618 = vadd.f32 %v450, %v617
          %619 = vmatmul.bf16.gmra.mxu0 %v599
          %v620 = vpop.f32.mrf.mxu0
          %v621 = vadd.f32 %v450, %v620
          %v622 = vpop.f32.mrf.mxu0
          %v623 = vadd.f32 %v450, %v622
          %624 = vmatmul.bf16.gmra.mxu0 %v600
          %v625 = vpop.f32.mrf.mxu0
          %v626 = vadd.f32 %v450, %v625
          %v627 = vpop.f32.mrf.mxu0
          %v628 = vadd.f32 %v450, %v627
          %629 = vmatmul.bf16.gmra.mxu0 %v601
          %v630 = vpop.f32.mrf.mxu0
          %v631 = vadd.f32 %v450, %v630
          %v632 = vpop.f32.mrf.mxu0
          %v633 = vadd.f32 %v450, %v632
          %634 = vmatmul.bf16.gmra.mxu0 %v602
          %v635 = vpop.f32.mrf.mxu0
          %v636 = vadd.f32 %v450, %v635
          %v637 = vpop.f32.mrf.mxu0
          %v638 = vadd.f32 %v450, %v637
          %639 = vmatmul.bf16.gmra.mxu0 %v603
          %v640 = vpop.f32.mrf.mxu0
          %v641 = vadd.f32 %v450, %v640
          %v642 = vpop.f32.mrf.mxu0
          %v643 = vadd.f32 %v450, %v642
          %644 = vmatmul.bf16.gmra.mxu0 %v604
          %v645 = vpop.f32.mrf.mxu0
          %v646 = vadd.f32 %v450, %v645
          %v647 = vpop.f32.mrf.mxu0
          %v648 = vadd.f32 %v450, %v647
          %649 = vmatmul.bf16.gmra.mxu0 %v605
          %v650 = vpop.f32.mrf.mxu0
          %v651 = vadd.f32 %v450, %v650
          %v652 = vpop.f32.mrf.mxu0
          %v653 = vadd.f32 %v450, %v652
          %654 = vdwg.mxu0
          %v655 = vmax.f32 %v616, 0.0
          %v656 = vmax.f32 %v618, 0.0
          %v657 = vmax.f32 %v621, 0.0
          %v658 = vmax.f32 %v623, 0.0
          %v659 = vmax.f32 %v626, 0.0
          %v660 = vmax.f32 %v628, 0.0
          %v661 = vmax.f32 %v631, 0.0
          %v662 = vmax.f32 %v633, 0.0
          %v663 = vmax.f32 %v636, 0.0
          %v664 = vmax.f32 %v638, 0.0
          %v665 = vmax.f32 %v641, 0.0
          %v666 = vmax.f32 %v643, 0.0
          %v667 = vmax.f32 %v646, 0.0
          %v668 = vmax.f32 %v648, 0.0
          %v669 = vmax.f32 %v651, 0.0
          %v670 = vmax.f32 %v653, 0.0
          %s671 = scalar_lea.vmem [#allocation2], 216
          %672 = vst [vmem:[%s671 + $0x1] sm:$0xff] %v655
          %673 = vst [vmem:[%s671 + $0x9] sm:$0xff] %v656
          %674 = vst [vmem:[%s671 + $0x19] sm:$0xff] %v657
          %675 = vst [vmem:[%s671 + $0x21] sm:$0xff] %v658
          %676 = vst [vmem:[%s671 + $0x31] sm:$0xff] %v659
          %677 = vst [vmem:[%s671 + $0x39] sm:$0xff] %v660
          %678 = vst [vmem:[%s671 + $0x49] sm:$0xff] %v661
          %679 = vst [vmem:[%s671 + $0x51] sm:$0xff] %v662
          %680 = vst [vmem:[%s671 + $0x61] sm:$0xff] %v663
          %681 = vst [vmem:[%s671 + $0x69] sm:$0xff] %v664
          %682 = vst [vmem:[%s671 + $0x79] sm:$0xff] %v665
          %683 = vst [vmem:[%s671 + $0x81] sm:$0xff] %v666
          %684 = vst [vmem:[%s671 + $0x91] sm:$0xff] %v667
          %685 = vst [vmem:[%s671 + $0x99] sm:$0xff] %v668
          %686 = vst [vmem:[%s671 + $0xa9] sm:$0xff] %v669
          %687 = vst [vmem:[%s671 + $0xb1] sm:$0xff] %v670
        $region68: #{tpu_custom_call.1} parent=47 // pred_fallthru
          _
        %s688 = smul.u32 %s31, 8
        %v689 = vld [vmem:[#allocation8] sm:$0xff]
        %v690 = vld [vmem:[#allocation8 + $0x8] sm:$0x1]
        %s691 = smul.u32 %s688, 24
        %s692 = scalar_lea.vmem [#allocation2], %s691
        %v693 = vld [vmem:[%s692] sm:$0xff]
        %v694 = vld [vmem:[%s692 + $0x8] sm:$0xff]
        %v695 = vld [vmem:[%s692 + $0x18] sm:$0xff]
        %v696 = vld [vmem:[%s692 + $0x20] sm:$0xff]
        %v697 = vld [vmem:[%s692 + $0x30] sm:$0xff]
        %v698 = vld [vmem:[%s692 + $0x38] sm:$0xff]
        %v699 = vld [vmem:[%s692 + $0x48] sm:$0xff]
        %v700 = vld [vmem:[%s692 + $0x50] sm:$0xff]
        %v701 = vld [vmem:[%s692 + $0x60] sm:$0xff]
        %v702 = vld [vmem:[%s692 + $0x68] sm:$0xff]
        %v703 = vld [vmem:[%s692 + $0x78] sm:$0xff]
        %v704 = vld [vmem:[%s692 + $0x80] sm:$0xff]
        %v705 = vld [vmem:[%s692 + $0x90] sm:$0xff]
        %v706 = vld [vmem:[%s692 + $0x98] sm:$0xff]
        %v707 = vld [vmem:[%s692 + $0xa8] sm:$0xff]
        %v708 = vld [vmem:[%s692 + $0xb0] sm:$0xff]
        %v709 = vperm.slane %v689, 0
        %v710 = vmul.f32 %v693, %v709
        %v711 = vmul.f32 %v694, %v709
        %v712 = vmul.f32 %v695, %v709
        %v713 = vmul.f32 %v696, %v709
        %v714 = vmul.f32 %v697, %v709
        %v715 = vmul.f32 %v698, %v709
        %v716 = vmul.f32 %v699, %v709
        %v717 = vmul.f32 %v700, %v709
        %v718 = vmul.f32 %v701, %v709
        %v719 = vmul.f32 %v702, %v709
        %v720 = vmul.f32 %v703, %v709
        %v721 = vmul.f32 %v704, %v709
        %v722 = vmul.f32 %v705, %v709
        %v723 = vmul.f32 %v706, %v709
        %v724 = vmul.f32 %v707, %v709
        %v725 = vmul.f32 %v708, %v709
        %v726 = vld [vmem:[%s692 + $0x1] sm:$0xff]
        %v727 = vld [vmem:[%s692 + $0x9] sm:$0xff]
        %v728 = vld [vmem:[%s692 + $0x19] sm:$0xff]
        %v729 = vld [vmem:[%s692 + $0x21] sm:$0xff]
        %v730 = vld [vmem:[%s692 + $0x31] sm:$0xff]
        %v731 = vld [vmem:[%s692 + $0x39] sm:$0xff]
        %v732 = vld [vmem:[%s692 + $0x49] sm:$0xff]
        %v733 = vld [vmem:[%s692 + $0x51] sm:$0xff]
        %v734 = vld [vmem:[%s692 + $0x61] sm:$0xff]
        %v735 = vld [vmem:[%s692 + $0x69] sm:$0xff]
        %v736 = vld [vmem:[%s692 + $0x79] sm:$0xff]
        %v737 = vld [vmem:[%s692 + $0x81] sm:$0xff]
        %v738 = vld [vmem:[%s692 + $0x91] sm:$0xff]
        %v739 = vld [vmem:[%s692 + $0x99] sm:$0xff]
        %v740 = vld [vmem:[%s692 + $0xa9] sm:$0xff]
        %v741 = vld [vmem:[%s692 + $0xb1] sm:$0xff]
        %v742 = vperm.slane %v689, 1
        %v743 = vmul.f32 %v726, %v742
        %v744 = vmul.f32 %v727, %v742
        %v745 = vmul.f32 %v728, %v742
        %v746 = vmul.f32 %v729, %v742
        %v747 = vmul.f32 %v730, %v742
        %v748 = vmul.f32 %v731, %v742
        %v749 = vmul.f32 %v732, %v742
        %v750 = vmul.f32 %v733, %v742
        %v751 = vmul.f32 %v734, %v742
        %v752 = vmul.f32 %v735, %v742
        %v753 = vmul.f32 %v736, %v742
        %v754 = vmul.f32 %v737, %v742
        %v755 = vmul.f32 %v738, %v742
        %v756 = vmul.f32 %v739, %v742
        %v757 = vmul.f32 %v740, %v742
        %v758 = vmul.f32 %v741, %v742
        %v759 = vadd.f32 %v710, %v743
        %v760 = vadd.f32 %v711, %v744
        %v761 = vadd.f32 %v712, %v745
        %v762 = vadd.f32 %v713, %v746
        %v763 = vadd.f32 %v714, %v747
        %v764 = vadd.f32 %v715, %v748
        %v765 = vadd.f32 %v716, %v749
        %v766 = vadd.f32 %v717, %v750
        %v767 = vadd.f32 %v718, %v751
        %v768 = vadd.f32 %v719, %v752
        %v769 = vadd.f32 %v720, %v753
        %v770 = vadd.f32 %v721, %v754
        %v771 = vadd.f32 %v722, %v755
        %v772 = vadd.f32 %v723, %v756
        %v773 = vadd.f32 %v724, %v757
        %v774 = vadd.f32 %v725, %v758
        %v775 = vld [vmem:[%s692 + $0x2] sm:$0xff]
        %v776 = vld [vmem:[%s692 + $0xa] sm:$0xff]
        %v777 = vld [vmem:[%s692 + $0x1a] sm:$0xff]
        %v778 = vld [vmem:[%s692 + $0x22] sm:$0xff]
        %v779 = vld [vmem:[%s692 + $0x32] sm:$0xff]
        %v780 = vld [vmem:[%s692 + $0x3a] sm:$0xff]
        %v781 = vld [vmem:[%s692 + $0x4a] sm:$0xff]
        %v782 = vld [vmem:[%s692 + $0x52] sm:$0xff]
        %v783 = vld [vmem:[%s692 + $0x62] sm:$0xff]
        %v784 = vld [vmem:[%s692 + $0x6a] sm:$0xff]
        %v785 = vld [vmem:[%s692 + $0x7a] sm:$0xff]
        %v786 = vld [vmem:[%s692 + $0x82] sm:$0xff]
        %v787 = vld [vmem:[%s692 + $0x92] sm:$0xff]
        %v788 = vld [vmem:[%s692 + $0x9a] sm:$0xff]
        %v789 = vld [vmem:[%s692 + $0xaa] sm:$0xff]
        %v790 = vld [vmem:[%s692 + $0xb2] sm:$0xff]
        %v791 = vperm.slane %v689, 2
        %v792 = vmul.f32 %v775, %v791
        %v793 = vmul.f32 %v776, %v791
        %v794 = vmul.f32 %v777, %v791
        %v795 = vmul.f32 %v778, %v791
        %v796 = vmul.f32 %v779, %v791
        %v797 = vmul.f32 %v780, %v791
        %v798 = vmul.f32 %v781, %v791
        %v799 = vmul.f32 %v782, %v791
        %v800 = vmul.f32 %v783, %v791
        %v801 = vmul.f32 %v784, %v791
        %v802 = vmul.f32 %v785, %v791
        %v803 = vmul.f32 %v786, %v791
        %v804 = vmul.f32 %v787, %v791
        %v805 = vmul.f32 %v788, %v791
        %v806 = vmul.f32 %v789, %v791
        %v807 = vmul.f32 %v790, %v791
        %v808 = vadd.f32 %v759, %v792
        %v809 = vadd.f32 %v760, %v793
        %v810 = vadd.f32 %v761, %v794
        %v811 = vadd.f32 %v762, %v795
        %v812 = vadd.f32 %v763, %v796
        %v813 = vadd.f32 %v764, %v797
        %v814 = vadd.f32 %v765, %v798
        %v815 = vadd.f32 %v766, %v799
        %v816 = vadd.f32 %v767, %v800
        %v817 = vadd.f32 %v768, %v801
        %v818 = vadd.f32 %v769, %v802
        %v819 = vadd.f32 %v770, %v803
        %v820 = vadd.f32 %v771, %v804
        %v821 = vadd.f32 %v772, %v805
        %v822 = vadd.f32 %v773, %v806
        %v823 = vadd.f32 %v774, %v807
        %s824 = sadd.s32 %s688, 1
        %s825 = smul.u32 %s824, 24
        %s826 = scalar_lea.vmem [#allocation2], %s825
        %v827 = vld [vmem:[%s826] sm:$0xff]
        %v828 = vld [vmem:[%s826 + $0x8] sm:$0xff]
        %v829 = vld [vmem:[%s826 + $0x18] sm:$0xff]
        %v830 = vld [vmem:[%s826 + $0x20] sm:$0xff]
        %v831 = vld [vmem:[%s826 + $0x30] sm:$0xff]
        %v832 = vld [vmem:[%s826 + $0x38] sm:$0xff]
        %v833 = vld [vmem:[%s826 + $0x48] sm:$0xff]
        %v834 = vld [vmem:[%s826 + $0x50] sm:$0xff]
        %v835 = vld [vmem:[%s826 + $0x60] sm:$0xff]
        %v836 = vld [vmem:[%s826 + $0x68] sm:$0xff]
        %v837 = vld [vmem:[%s826 + $0x78] sm:$0xff]
        %v838 = vld [vmem:[%s826 + $0x80] sm:$0xff]
        %v839 = vld [vmem:[%s826 + $0x90] sm:$0xff]
        %v840 = vld [vmem:[%s826 + $0x98] sm:$0xff]
        %v841 = vld [vmem:[%s826 + $0xa8] sm:$0xff]
        %v842 = vld [vmem:[%s826 + $0xb0] sm:$0xff]
        %v843 = vperm.slane %v689, 3
        %v844 = vmul.f32 %v827, %v843
        %v845 = vmul.f32 %v828, %v843
        %v846 = vmul.f32 %v829, %v843
        %v847 = vmul.f32 %v830, %v843
        %v848 = vmul.f32 %v831, %v843
        %v849 = vmul.f32 %v832, %v843
        %v850 = vmul.f32 %v833, %v843
        %v851 = vmul.f32 %v834, %v843
        %v852 = vmul.f32 %v835, %v843
        %v853 = vmul.f32 %v836, %v843
        %v854 = vmul.f32 %v837, %v843
        %v855 = vmul.f32 %v838, %v843
        %v856 = vmul.f32 %v839, %v843
        %v857 = vmul.f32 %v840, %v843
        %v858 = vmul.f32 %v841, %v843
        %v859 = vmul.f32 %v842, %v843
        %v860 = vadd.f32 %v808, %v844
        %v861 = vadd.f32 %v809, %v845
        %v862 = vadd.f32 %v810, %v846
        %v863 = vadd.f32 %v811, %v847
        %v864 = vadd.f32 %v812, %v848
        %v865 = vadd.f32 %v813, %v849
        %v866 = vadd.f32 %v814, %v850
        %v867 = vadd.f32 %v815, %v851
        %v868 = vadd.f32 %v816, %v852
        %v869 = vadd.f32 %v817, %v853
        %v870 = vadd.f32 %v818, %v854
        %v871 = vadd.f32 %v819, %v855
        %v872 = vadd.f32 %v820, %v856
        %v873 = vadd.f32 %v821, %v857
        %v874 = vadd.f32 %v822, %v858
        %v875 = vadd.f32 %v823, %v859
        %v876 = vld [vmem:[%s826 + $0x1] sm:$0xff]
        %v877 = vld [vmem:[%s826 + $0x9] sm:$0xff]
        %v878 = vld [vmem:[%s826 + $0x19] sm:$0xff]
        %v879 = vld [vmem:[%s826 + $0x21] sm:$0xff]
        %v880 = vld [vmem:[%s826 + $0x31] sm:$0xff]
        %v881 = vld [vmem:[%s826 + $0x39] sm:$0xff]
        %v882 = vld [vmem:[%s826 + $0x49] sm:$0xff]
        %v883 = vld [vmem:[%s826 + $0x51] sm:$0xff]
        %v884 = vld [vmem:[%s826 + $0x61] sm:$0xff]
        %v885 = vld [vmem:[%s826 + $0x69] sm:$0xff]
        %v886 = vld [vmem:[%s826 + $0x79] sm:$0xff]
        %v887 = vld [vmem:[%s826 + $0x81] sm:$0xff]
        %v888 = vld [vmem:[%s826 + $0x91] sm:$0xff]
        %v889 = vld [vmem:[%s826 + $0x99] sm:$0xff]
        %v890 = vld [vmem:[%s826 + $0xa9] sm:$0xff]
        %v891 = vld [vmem:[%s826 + $0xb1] sm:$0xff]
        %v892 = vperm.slane %v689, 4
        %v893 = vmul.f32 %v876, %v892
        %v894 = vmul.f32 %v877, %v892
        %v895 = vmul.f32 %v878, %v892
        %v896 = vmul.f32 %v879, %v892
        %v897 = vmul.f32 %v880, %v892
        %v898 = vmul.f32 %v881, %v892
        %v899 = vmul.f32 %v882, %v892
        %v900 = vmul.f32 %v883, %v892
        %v901 = vmul.f32 %v884, %v892
        %v902 = vmul.f32 %v885, %v892
        %v903 = vmul.f32 %v886, %v892
        %v904 = vmul.f32 %v887, %v892
        %v905 = vmul.f32 %v888, %v892
        %v906 = vmul.f32 %v889, %v892
        %v907 = vmul.f32 %v890, %v892
        %v908 = vmul.f32 %v891, %v892
        %v909 = vadd.f32 %v860, %v893
        %v910 = vadd.f32 %v861, %v894
        %v911 = vadd.f32 %v862, %v895
        %v912 = vadd.f32 %v863, %v896
        %v913 = vadd.f32 %v864, %v897
        %v914 = vadd.f32 %v865, %v898
        %v915 = vadd.f32 %v866, %v899
        %v916 = vadd.f32 %v867, %v900
        %v917 = vadd.f32 %v868, %v901
        %v918 = vadd.f32 %v869, %v902
        %v919 = vadd.f32 %v870, %v903
        %v920 = vadd.f32 %v871, %v904
        %v921 = vadd.f32 %v872, %v905
        %v922 = vadd.f32 %v873, %v906
        %v923 = vadd.f32 %v874, %v907
        %v924 = vadd.f32 %v875, %v908
        %v925 = vld [vmem:[%s826 + $0x2] sm:$0xff]
        %v926 = vld [vmem:[%s826 + $0xa] sm:$0xff]
        %v927 = vld [vmem:[%s826 + $0x1a] sm:$0xff]
        %v928 = vld [vmem:[%s826 + $0x22] sm:$0xff]
        %v929 = vld [vmem:[%s826 + $0x32] sm:$0xff]
        %v930 = vld [vmem:[%s826 + $0x3a] sm:$0xff]
        %v931 = vld [vmem:[%s826 + $0x4a] sm:$0xff]
        %v932 = vld [vmem:[%s826 + $0x52] sm:$0xff]
        %v933 = vld [vmem:[%s826 + $0x62] sm:$0xff]
        %v934 = vld [vmem:[%s826 + $0x6a] sm:$0xff]
        %v935 = vld [vmem:[%s826 + $0x7a] sm:$0xff]
        %v936 = vld [vmem:[%s826 + $0x82] sm:$0xff]
        %v937 = vld [vmem:[%s826 + $0x92] sm:$0xff]
        %v938 = vld [vmem:[%s826 + $0x9a] sm:$0xff]
        %v939 = vld [vmem:[%s826 + $0xaa] sm:$0xff]
        %v940 = vld [vmem:[%s826 + $0xb2] sm:$0xff]
        %v941 = vperm.slane %v689, 5
        %v942 = vmul.f32 %v925, %v941
        %v943 = vmul.f32 %v926, %v941
        %v944 = vmul.f32 %v927, %v941
        %v945 = vmul.f32 %v928, %v941
        %v946 = vmul.f32 %v929, %v941
        %v947 = vmul.f32 %v930, %v941
        %v948 = vmul.f32 %v931, %v941
        %v949 = vmul.f32 %v932, %v941
        %v950 = vmul.f32 %v933, %v941
        %v951 = vmul.f32 %v934, %v941
        %v952 = vmul.f32 %v935, %v941
        %v953 = vmul.f32 %v936, %v941
        %v954 = vmul.f32 %v937, %v941
        %v955 = vmul.f32 %v938, %v941
        %v956 = vmul.f32 %v939, %v941
        %v957 = vmul.f32 %v940, %v941
        %v958 = vadd.f32 %v909, %v942
        %v959 = vadd.f32 %v910, %v943
        %v960 = vadd.f32 %v911, %v944
        %v961 = vadd.f32 %v912, %v945
        %v962 = vadd.f32 %v913, %v946
        %v963 = vadd.f32 %v914, %v947
        %v964 = vadd.f32 %v915, %v948
        %v965 = vadd.f32 %v916, %v949
        %v966 = vadd.f32 %v917, %v950
        %v967 = vadd.f32 %v918, %v951
        %v968 = vadd.f32 %v919, %v952
        %v969 = vadd.f32 %v920, %v953
        %v970 = vadd.f32 %v921, %v954
        %v971 = vadd.f32 %v922, %v955
        %v972 = vadd.f32 %v923, %v956
        %v973 = vadd.f32 %v924, %v957
        %s974 = sadd.s32 %s688, 2
        %s975 = smul.u32 %s974, 24
        %s976 = scalar_lea.vmem [#allocation2], %s975
        %v977 = vld [vmem:[%s976] sm:$0xff]
        %v978 = vld [vmem:[%s976 + $0x8] sm:$0xff]
        %v979 = vld [vmem:[%s976 + $0x18] sm:$0xff]
        %v980 = vld [vmem:[%s976 + $0x20] sm:$0xff]
        %v981 = vld [vmem:[%s976 + $0x30] sm:$0xff]
        %v982 = vld [vmem:[%s976 + $0x38] sm:$0xff]
        %v983 = vld [vmem:[%s976 + $0x48] sm:$0xff]
        %v984 = vld [vmem:[%s976 + $0x50] sm:$0xff]
        %v985 = vld [vmem:[%s976 + $0x60] sm:$0xff]
        %v986 = vld [vmem:[%s976 + $0x68] sm:$0xff]
        %v987 = vld [vmem:[%s976 + $0x78] sm:$0xff]
        %v988 = vld [vmem:[%s976 + $0x80] sm:$0xff]
        %v989 = vld [vmem:[%s976 + $0x90] sm:$0xff]
        %v990 = vld [vmem:[%s976 + $0x98] sm:$0xff]
        %v991 = vld [vmem:[%s976 + $0xa8] sm:$0xff]
        %v992 = vld [vmem:[%s976 + $0xb0] sm:$0xff]
        %v993 = vperm.slane %v689, 6
        %v994 = vmul.f32 %v977, %v993
        %v995 = vmul.f32 %v978, %v993
        %v996 = vmul.f32 %v979, %v993
        %v997 = vmul.f32 %v980, %v993
        %v998 = vmul.f32 %v981, %v993
        %v999 = vmul.f32 %v982, %v993
        %v1000 = vmul.f32 %v983, %v993
        %v1001 = vmul.f32 %v984, %v993
        %v1002 = vmul.f32 %v985, %v993
        %v1003 = vmul.f32 %v986, %v993
        %v1004 = vmul.f32 %v987, %v993
        %v1005 = vmul.f32 %v988, %v993
        %v1006 = vmul.f32 %v989, %v993
        %v1007 = vmul.f32 %v990, %v993
        %v1008 = vmul.f32 %v991, %v993
        %v1009 = vmul.f32 %v992, %v993
        %v1010 = vadd.f32 %v958, %v994
        %v1011 = vadd.f32 %v959, %v995
        %v1012 = vadd.f32 %v960, %v996
        %v1013 = vadd.f32 %v961, %v997
        %v1014 = vadd.f32 %v962, %v998
        %v1015 = vadd.f32 %v963, %v999
        %v1016 = vadd.f32 %v964, %v1000
        %v1017 = vadd.f32 %v965, %v1001
        %v1018 = vadd.f32 %v966, %v1002
        %v1019 = vadd.f32 %v967, %v1003
        %v1020 = vadd.f32 %v968, %v1004
        %v1021 = vadd.f32 %v969, %v1005
        %v1022 = vadd.f32 %v970, %v1006
        %v1023 = vadd.f32 %v971, %v1007
        %v1024 = vadd.f32 %v972, %v1008
        %v1025 = vadd.f32 %v973, %v1009
        %v1026 = vld [vmem:[%s976 + $0x1] sm:$0xff]
        %v1027 = vld [vmem:[%s976 + $0x9] sm:$0xff]
        %v1028 = vld [vmem:[%s976 + $0x19] sm:$0xff]
        %v1029 = vld [vmem:[%s976 + $0x21] sm:$0xff]
        %v1030 = vld [vmem:[%s976 + $0x31] sm:$0xff]
        %v1031 = vld [vmem:[%s976 + $0x39] sm:$0xff]
        %v1032 = vld [vmem:[%s976 + $0x49] sm:$0xff]
        %v1033 = vld [vmem:[%s976 + $0x51] sm:$0xff]
        %v1034 = vld [vmem:[%s976 + $0x61] sm:$0xff]
        %v1035 = vld [vmem:[%s976 + $0x69] sm:$0xff]
        %v1036 = vld [vmem:[%s976 + $0x79] sm:$0xff]
        %v1037 = vld [vmem:[%s976 + $0x81] sm:$0xff]
        %v1038 = vld [vmem:[%s976 + $0x91] sm:$0xff]
        %v1039 = vld [vmem:[%s976 + $0x99] sm:$0xff]
        %v1040 = vld [vmem:[%s976 + $0xa9] sm:$0xff]
        %v1041 = vld [vmem:[%s976 + $0xb1] sm:$0xff]
        %v1042 = vperm.slane %v689, 7
        %v1043 = vmul.f32 %v1026, %v1042
        %v1044 = vmul.f32 %v1027, %v1042
        %v1045 = vmul.f32 %v1028, %v1042
        %v1046 = vmul.f32 %v1029, %v1042
        %v1047 = vmul.f32 %v1030, %v1042
        %v1048 = vmul.f32 %v1031, %v1042
        %v1049 = vmul.f32 %v1032, %v1042
        %v1050 = vmul.f32 %v1033, %v1042
        %v1051 = vmul.f32 %v1034, %v1042
        %v1052 = vmul.f32 %v1035, %v1042
        %v1053 = vmul.f32 %v1036, %v1042
        %v1054 = vmul.f32 %v1037, %v1042
        %v1055 = vmul.f32 %v1038, %v1042
        %v1056 = vmul.f32 %v1039, %v1042
        %v1057 = vmul.f32 %v1040, %v1042
        %v1058 = vmul.f32 %v1041, %v1042
        %v1059 = vadd.f32 %v1010, %v1043
        %v1060 = vadd.f32 %v1011, %v1044
        %v1061 = vadd.f32 %v1012, %v1045
        %v1062 = vadd.f32 %v1013, %v1046
        %v1063 = vadd.f32 %v1014, %v1047
        %v1064 = vadd.f32 %v1015, %v1048
        %v1065 = vadd.f32 %v1016, %v1049
        %v1066 = vadd.f32 %v1017, %v1050
        %v1067 = vadd.f32 %v1018, %v1051
        %v1068 = vadd.f32 %v1019, %v1052
        %v1069 = vadd.f32 %v1020, %v1053
        %v1070 = vadd.f32 %v1021, %v1054
        %v1071 = vadd.f32 %v1022, %v1055
        %v1072 = vadd.f32 %v1023, %v1056
        %v1073 = vadd.f32 %v1024, %v1057
        %v1074 = vadd.f32 %v1025, %v1058
        %v1075 = vld [vmem:[%s976 + $0x2] sm:$0xff]
        %v1076 = vld [vmem:[%s976 + $0xa] sm:$0xff]
        %v1077 = vld [vmem:[%s976 + $0x1a] sm:$0xff]
        %v1078 = vld [vmem:[%s976 + $0x22] sm:$0xff]
        %v1079 = vld [vmem:[%s976 + $0x32] sm:$0xff]
        %v1080 = vld [vmem:[%s976 + $0x3a] sm:$0xff]
        %v1081 = vld [vmem:[%s976 + $0x4a] sm:$0xff]
        %v1082 = vld [vmem:[%s976 + $0x52] sm:$0xff]
        %v1083 = vld [vmem:[%s976 + $0x62] sm:$0xff]
        %v1084 = vld [vmem:[%s976 + $0x6a] sm:$0xff]
        %v1085 = vld [vmem:[%s976 + $0x7a] sm:$0xff]
        %v1086 = vld [vmem:[%s976 + $0x82] sm:$0xff]
        %v1087 = vld [vmem:[%s976 + $0x92] sm:$0xff]
        %v1088 = vld [vmem:[%s976 + $0x9a] sm:$0xff]
        %v1089 = vld [vmem:[%s976 + $0xaa] sm:$0xff]
        %v1090 = vld [vmem:[%s976 + $0xb2] sm:$0xff]
        %v1091 = vperm.slane %v690, 0
        %v1092 = vmul.f32 %v1075, %v1091
        %v1093 = vmul.f32 %v1076, %v1091
        %v1094 = vmul.f32 %v1077, %v1091
        %v1095 = vmul.f32 %v1078, %v1091
        %v1096 = vmul.f32 %v1079, %v1091
        %v1097 = vmul.f32 %v1080, %v1091
        %v1098 = vmul.f32 %v1081, %v1091
        %v1099 = vmul.f32 %v1082, %v1091
        %v1100 = vmul.f32 %v1083, %v1091
        %v1101 = vmul.f32 %v1084, %v1091
        %v1102 = vmul.f32 %v1085, %v1091
        %v1103 = vmul.f32 %v1086, %v1091
        %v1104 = vmul.f32 %v1087, %v1091
        %v1105 = vmul.f32 %v1088, %v1091
        %v1106 = vmul.f32 %v1089, %v1091
        %v1107 = vmul.f32 %v1090, %v1091
        %v1108 = vadd.f32 %v1059, %v1092
        %v1109 = vadd.f32 %v1060, %v1093
        %v1110 = vadd.f32 %v1061, %v1094
        %v1111 = vadd.f32 %v1062, %v1095
        %v1112 = vadd.f32 %v1063, %v1096
        %v1113 = vadd.f32 %v1064, %v1097
        %v1114 = vadd.f32 %v1065, %v1098
        %v1115 = vadd.f32 %v1066, %v1099
        %v1116 = vadd.f32 %v1067, %v1100
        %v1117 = vadd.f32 %v1068, %v1101
        %v1118 = vadd.f32 %v1069, %v1102
        %v1119 = vadd.f32 %v1070, %v1103
        %v1120 = vadd.f32 %v1071, %v1104
        %v1121 = vadd.f32 %v1072, %v1105
        %v1122 = vadd.f32 %v1073, %v1106
        %v1123 = vadd.f32 %v1074, %v1107
        %v1124 = vld [vmem:[%s4] sm:$0x1]
        %v1126 = vperm.slane %v1124, 0
        %v1128 = vadd.f32 %v1108, %v1126
        %v1129 = vadd.f32 %v1109, %v1126
        %v1130 = vadd.f32 %v1110, %v1126
        %v1131 = vadd.f32 %v1111, %v1126
        %v1132 = vadd.f32 %v1112, %v1126
        %v1133 = vadd.f32 %v1113, %v1126
        %v1134 = vadd.f32 %v1114, %v1126
        %v1135 = vadd.f32 %v1115, %v1126
        %v1136 = vadd.f32 %v1116, %v1126
        %v1137 = vadd.f32 %v1117, %v1126
        %v1138 = vadd.f32 %v1118, %v1126
        %v1139 = vadd.f32 %v1119, %v1126
        %v1140 = vadd.f32 %v1120, %v1126
        %v1141 = vadd.f32 %v1121, %v1126
        %v1142 = vadd.f32 %v1122, %v1126
        %v1143 = vadd.f32 %v1123, %v1126
        %v1144 = vmax.f32 %v1128, 0.0
        %v1145 = vmax.f32 %v1129, 0.0
        %v1146 = vmax.f32 %v1130, 0.0
        %v1147 = vmax.f32 %v1131, 0.0
        %v1148 = vmax.f32 %v1132, 0.0
        %v1149 = vmax.f32 %v1133, 0.0
        %v1150 = vmax.f32 %v1134, 0.0
        %v1151 = vmax.f32 %v1135, 0.0
        %v1152 = vmax.f32 %v1136, 0.0
        %v1153 = vmax.f32 %v1137, 0.0
        %v1154 = vmax.f32 %v1138, 0.0
        %v1155 = vmax.f32 %v1139, 0.0
        %v1156 = vmax.f32 %v1140, 0.0
        %v1157 = vmax.f32 %v1141, 0.0
        %v1158 = vmax.f32 %v1142, 0.0
        %v1159 = vmax.f32 %v1143, 0.0
        %v1160 = vpack.c.bf16 %v1145, %v1144
        %v1161 = vpack.c.bf16 %v1147, %v1146
        %v1162 = vpack.c.bf16 %v1149, %v1148
        %v1163 = vpack.c.bf16 %v1151, %v1150
        %v1164 = vpack.c.bf16 %v1153, %v1152
        %v1165 = vpack.c.bf16 %v1155, %v1154
        %v1166 = vpack.c.bf16 %v1157, %v1156
        %v1167 = vpack.c.bf16 %v1159, %v1158
        %v1168 = vld [vmem:[#allocation9] sm:$0xf]
        %v1169 = vld [vmem:[#allocation9 + $0x4] sm:$0xf]
        %v1170 = vld [vmem:[#allocation9 + $0x8] sm:$0xf]
        %v1171 = vld [vmem:[#allocation9 + $0xc] sm:$0xf]
        %v1172 = vld [vmem:[#allocation9 + $0x10] sm:$0xf]
        %v1173 = vld [vmem:[#allocation9 + $0x14] sm:$0xf]
        %v1174 = vld [vmem:[#allocation9 + $0x18] sm:$0xf]
        %v1175 = vld [vmem:[#allocation9 + $0x1c] sm:$0xf]
        %v1176 = vld [vmem:[#allocation9 + $0x20] sm:$0xf]
        %v1177 = vld [vmem:[#allocation9 + $0x24] sm:$0xf]
        %v1178 = vld [vmem:[#allocation9 + $0x28] sm:$0xf]
        %v1179 = vld [vmem:[#allocation9 + $0x2c] sm:$0xf]
        %v1180 = vld [vmem:[#allocation9 + $0x30] sm:$0xf]
        %v1181 = vld [vmem:[#allocation9 + $0x34] sm:$0xf]
        %v1182 = vld [vmem:[#allocation9 + $0x38] sm:$0xf]
        %v1183 = vld [vmem:[#allocation9 + $0x3c] sm:$0xf]
        %v1184 = vld [vmem:[%s6] sm:$0x1]
        %v1186 = vperm.slane %v1184, 0
        %v1204 = vunpack.c.l.b16 %v1168
        %v1205 = vunpack.c.l.b16 %v1169
        %v1206 = vunpack.c.l.b16 %v1170
        %v1207 = vunpack.c.l.b16 %v1171
        %v1208 = vunpack.c.l.b16 %v1172
        %v1209 = vunpack.c.l.b16 %v1173
        %v1210 = vunpack.c.l.b16 %v1174
        %v1211 = vunpack.c.l.b16 %v1175
        %v1212 = vunpack.c.l.b16 %v1176
        %v1213 = vunpack.c.l.b16 %v1177
        %v1214 = vunpack.c.l.b16 %v1178
        %v1215 = vunpack.c.l.b16 %v1179
        %v1216 = vunpack.c.l.b16 %v1180
        %v1217 = vunpack.c.l.b16 %v1181
        %v1218 = vunpack.c.l.b16 %v1182
        %v1219 = vunpack.c.l.b16 %v1183
        %v1220 = vpack.c.b16 %v1205, %v1204
        %v1221 = vpack.c.b16 %v1207, %v1206
        %v1222 = vpack.c.b16 %v1209, %v1208
        %v1223 = vpack.c.b16 %v1211, %v1210
        %v1224 = vpack.c.b16 %v1213, %v1212
        %v1225 = vpack.c.b16 %v1215, %v1214
        %v1226 = vpack.c.b16 %v1217, %v1216
        %v1227 = vpack.c.b16 %v1219, %v1218
        %1236 = vmatpush.bf16.msra.mxu0 %v1227
        %1237 = vmatpush.bf16.msra.mxu0 %v1226
        %1238 = vmatpush.bf16.msra.mxu0 %v1225
        %1239 = vmatpush.bf16.msra.mxu0 %v1224
        %1240 = vmatpush.bf16.msra.mxu0 %v1223
        %1241 = vmatpush.bf16.msra.mxu0 %v1222
        %1242 = vmatpush.bf16.msra.mxu0 %v1221
        %1243 = vmatpush.bf16.msra.mxu0 %v1220
        %1244 = vmatmul.bf16.gmra.mxu0 %v1160
        %v1245 = vpop.f32.mrf.mxu0
        %v1246 = vadd.f32 %v1186, %v1245
        %v1247 = vpop.f32.mrf.mxu0
        %v1248 = vadd.f32 %v1186, %v1247
        %1249 = vmatmul.bf16.gmra.mxu0 %v1161
        %v1250 = vpop.f32.mrf.mxu0
        %v1251 = vadd.f32 %v1186, %v1250
        %v1252 = vpop.f32.mrf.mxu0
        %v1253 = vadd.f32 %v1186, %v1252
        %1254 = vmatmul.bf16.gmra.mxu0 %v1162
        %v1255 = vpop.f32.mrf.mxu0
        %v1256 = vadd.f32 %v1186, %v1255
        %v1257 = vpop.f32.mrf.mxu0
        %v1258 = vadd.f32 %v1186, %v1257
        %1259 = vmatmul.bf16.gmra.mxu0 %v1163
        %v1260 = vpop.f32.mrf.mxu0
        %v1261 = vadd.f32 %v1186, %v1260
        %v1262 = vpop.f32.mrf.mxu0
        %v1263 = vadd.f32 %v1186, %v1262
        %1264 = vmatmul.bf16.gmra.mxu0 %v1164
        %v1265 = vpop.f32.mrf.mxu0
        %v1266 = vadd.f32 %v1186, %v1265
        %v1267 = vpop.f32.mrf.mxu0
        %v1268 = vadd.f32 %v1186, %v1267
        %1269 = vmatmul.bf16.gmra.mxu0 %v1165
        %v1270 = vpop.f32.mrf.mxu0
        %v1271 = vadd.f32 %v1186, %v1270
        %v1272 = vpop.f32.mrf.mxu0
        %v1273 = vadd.f32 %v1186, %v1272
        %1274 = vmatmul.bf16.gmra.mxu0 %v1166
        %v1275 = vpop.f32.mrf.mxu0
        %v1276 = vadd.f32 %v1186, %v1275
        %v1277 = vpop.f32.mrf.mxu0
        %v1278 = vadd.f32 %v1186, %v1277
        %1279 = vmatmul.bf16.gmra.mxu0 %v1167
        %v1280 = vpop.f32.mrf.mxu0
        %v1281 = vadd.f32 %v1186, %v1280
        %v1282 = vpop.f32.mrf.mxu0
        %v1283 = vadd.f32 %v1186, %v1282
        %1284 = vdwg.mxu0
        %1285 = vst [vmem:[%s362] sm:$0xff] %v1246
        %1286 = vst [vmem:[%s362 + $0x8] sm:$0xff] %v1248
        %1287 = vst [vmem:[%s362 + $0x10] sm:$0xff] %v1251
        %1288 = vst [vmem:[%s362 + $0x18] sm:$0xff] %v1253
        %1289 = vst [vmem:[%s362 + $0x20] sm:$0xff] %v1256
        %1290 = vst [vmem:[%s362 + $0x28] sm:$0xff] %v1258
        %1291 = vst [vmem:[%s362 + $0x30] sm:$0xff] %v1261
        %1292 = vst [vmem:[%s362 + $0x38] sm:$0xff] %v1263
        %1293 = vst [vmem:[%s362 + $0x40] sm:$0xff] %v1266
        %1294 = vst [vmem:[%s362 + $0x48] sm:$0xff] %v1268
        %1295 = vst [vmem:[%s362 + $0x50] sm:$0xff] %v1271
        %1296 = vst [vmem:[%s362 + $0x58] sm:$0xff] %v1273
        %1297 = vst [vmem:[%s362 + $0x60] sm:$0xff] %v1276
        %1298 = vst [vmem:[%s362 + $0x68] sm:$0xff] %v1278
        %1299 = vst [vmem:[%s362 + $0x70] sm:$0xff] %v1281
        %1300 = vst [vmem:[%s362 + $0x78] sm:$0xff] %v1283
        %s1301 = sand.u32 %s200, 1
        %s1302 = scalar_lea.sflag [#allocation5], %s1301
        %s1303 = sand.u32 %s200, 1
        %s1304 = smul.addr %s1303, 128
        %s1305 = scalar_lea.vmem [#allocation11], %s1304
        // Predicated region
        $region69: #{tpu_custom_call.1} parent=47 // pred_check
          %p1306 = pneg %p210
        $region70: #{tpu_custom_call.1} parent=47 // pred_check_branch
          %1308 = sbr.rel (%p1306) target = $region72
        $region71: #{tpu_custom_call.1} parent=47 // pred_region
          %s1309 = smul.u32 8, %s31
          %1311 = vsyncadd %s1302, 0
          %s1312 = smul.addr %s1309, 2
          %s1313 = smul.addr %s30, 32
          %s1314 = sadd.s32 %s1312, %s1313
          %s1315 = smul.addr %s1314, 8
          %s1316 = scalar_lea.hbm %s7, %s1315
          %s1317 = sshll.u32 %s1305, 4
          %s1318 = int_to_ptr.vmem [resolvable:$true] %s1317
          %s1319 = sshll.u32 %s1316, 4
          %s1320 = int_to_ptr.hbm [resolvable:$true] %s1319
          %1325 = dma.vmem_to_hbm [thread:$0]  %s1318, 2048, %s1320, %s1302, 128, 128, 8
        $region72: #{tpu_custom_call.1} parent=47 // pred_fallthru
          _
      $region48: #{tpu_custom_call.1} parent=5 // pred_fallthru
        _
      %p1326 = scmp.le.s32.totalorder 2, %s21
      // Predicated region
      $region73: #{tpu_custom_call.1} parent=5 // pred_check
        %p1327 = pneg %p1326
      $region74: #{tpu_custom_call.1} parent=5 // pred_check_branch
        %1329 = sbr.rel (%p1327) target = $region76
      $region75: #{tpu_custom_call.1} parent=5 // pred_region
        %s1330 = ssub.s32 %s21, 2
        // Predicated region
        $region77: #{tpu_custom_call.1} parent=75 // pred_check
          %p1331 = pneg %p216
        $region78: #{tpu_custom_call.1} parent=75 // pred_check_branch
          %1333 = sbr.rel (%p1331) target = $region80
        $region79: #{tpu_custom_call.1} parent=75 // pred_region
          %s1334 = sand.u32 %s201, 1
          %s1335 = scalar_lea.sflag [#allocation5], %s1334
          %s1336 = sand.u32 %s201, 1
          %s1337 = smul.addr %s1336, 128
          %s1338 = scalar_lea.vmem [#allocation11], %s1337
          %1340 = dma.done %s1335, 2048
        $region80: #{tpu_custom_call.1} parent=75 // pred_fallthru
          _
      $region76: #{tpu_custom_call.1} parent=5 // pred_fallthru
        _
    $region6: #{tpu_custom_call.1} parent=1 // loop_footer
      %s25 = sadd.s32 1, %s21
    $region7: #{tpu_custom_call.1} parent=1 // loop_footer_branch
      %20 = sbr.rel target = $region3
    $region8: #{tpu_custom_call.1} parent=1 // loop_exit
      _
    %1341 = vsyncpa [#allocation4], 1
    %s1342 = scalar_lea.sflag [#allocation4], 1
    %1343 = vsyncpa %s1342, 1
    %1344 = vsyncpa [#allocation7], 1
    %1345 = vsyncpa [#allocation10], 1
    %1346 = vsyncpa [#allocation5], 1
    %s1347 = scalar_lea.sflag [#allocation5], 1
    %1348 = vsyncpa %s1347, 1

</llo_original>
